<compile_context>
chip_gen: v7x
topology: tpu7x:2x2x1
jax: 0.10.0
libtpu: 0.0.40
codegen_flags: <defaults>
</compile_context>

<pallas_src>
import functools

import jax
import jax.numpy as jnp
from jax import lax
from jax.experimental import pallas as pl
from jax.experimental.pallas import tpu as pltpu


# ------------------------------ Pallas kernel -------------------------------


def _residual_block_kernel(x_ref, w1_ref, b1_ref, w2_ref, b2_ref,
                           sew1_ref, sew2_ref, o_ref,
                           xpad_ref, hpad_ref, slab_ref, *, H, W, inv_hw):
    """Fully fused ResidualBlock forward for a batch_tile slab of images.

    x_ref   : (B, H, W, C)    input tile (also the residual), compute dtype
    w1_ref  : (9*C, C)        conv1 taps, bn1 scale folded in
    b1_ref  : (1, C)          bn1 shift (f32)
    w2_ref  : (9*C, C)        conv2 taps, bn2 scale folded in
    b2_ref  : (1, C)          bn2 shift (f32)
    sew1_ref: (C, C//r)       SE fc1 weight (f32)
    sew2_ref: (C//r, C)       SE fc2 weight (f32)
    o_ref   : (B, H, W, C)    final block output
    xpad_ref: (B, H+2, W, C)  VMEM scratch: input with zero top/bottom rows
    hpad_ref: (B, H+2, W, C)  VMEM scratch: conv1 act with zero top/bottom rows
    slab_ref: (B*H*W, 9*C)    VMEM im2col slab (reused by both convs)
    """
    B = x_ref.shape[0]
    C = o_ref.shape[-1]
    cdt = xpad_ref.dtype
    M = B * H * W

    # Border-only zeroing: the horizontal halo is synthesized with roll + a
    # border mask below, so only the top/bottom halo rows are ever read as
    # padding.  Re-zeroed every step because with a "parallel" batch axis each
    # TensorCore only sees a subset of grid steps (no step-0-only init).
    zrow = jnp.zeros((B, 1, W, C), cdt)
    xpad_ref[:, 0:1, :, :] = zrow
    xpad_ref[:, H + 1:H + 2, :, :] = zrow
    hpad_ref[:, 0:1, :, :] = zrow
    hpad_ref[:, H + 1:H + 2, :, :] = zrow

    # Interior stored at row offset 1 (sublane/lane dims stay aligned).
    xpad_ref[:, 1:H + 1, :, :] = x_ref[...].astype(cdt)

    # Column-index mask, hoisted (JAX does not CSE broadcast_in_dim).
    w_idx = lax.broadcasted_iota(jnp.int32, (B, H, W, C), 2)

    def build_im2col(src_ref):
        # For each kernel row ky: kx=1 is the aligned slice itself; kx=0/kx=2
        # are sublane rotations (XLU) of that same slice with the wrapped
        # column masked to zero.  The 9 groups are written straight into the
        # slab — no jnp.concatenate, no unaligned sublane loads.
        for ky in range(3):
            center = src_ref[:, ky:ky + H, :, :]                   # (B,H,W,C)
            left = jnp.where(w_idx == 0, 0,
                             pltpu.roll(center, 1, axis=2))        # kx = 0
            right = jnp.where(w_idx == W - 1, 0,
                              pltpu.roll(center, W - 1, axis=2))   # kx = 2
            g = ky * 3
            slab_ref[:, (g + 0) * C:(g + 1) * C] = left.reshape(M, C)
            slab_ref[:, (g + 1) * C:(g + 2) * C] = center.reshape(M, C)
            slab_ref[:, (g + 2) * C:(g + 3) * C] = right.reshape(M, C)

    # conv1 (+ folded bn1) + ReLU : one MXU matmul, K = 9*C.
    build_im2col(xpad_ref)
    h = jnp.dot(slab_ref[...], w1_ref[...], preferred_element_type=jnp.float32)
    h = jnp.maximum(h + b1_ref[...], 0.0)
    hpad_ref[:, 1:H + 1, :, :] = h.reshape(B, H, W, C).astype(cdt)

    # conv2 (+ folded bn2) : one MXU matmul, K = 9*C.
    build_im2col(hpad_ref)
    y = jnp.dot(slab_ref[...], w2_ref[...], preferred_element_type=jnp.float32)
    y = (y + b2_ref[...]).reshape(B, H * W, C)

    # Fused SE epilogue (all f32): avg-pool -> fc1 -> ReLU -> fc2 -> sigmoid,
    # then channel scale + residual add + ReLU.  The FCs are tiny
    # ((B,C)@(C,C/16)@(C/16,C)); doing them here removes the extra HBM passes
    # (write y, re-read y, re-read residual) the old two-kernel version had.
    pooled = jnp.sum(y, axis=1) * inv_hw                                # (B,C)
    hidden = jnp.maximum(
        jnp.dot(pooled, sew1_ref[...], preferred_element_type=jnp.float32), 0.0)
    gate = jax.nn.sigmoid(
        jnp.dot(hidden, sew2_ref[...], preferred_element_type=jnp.float32))
    res = x_ref[...].astype(jnp.float32).reshape(B, H * W, C)
    out = jnp.maximum(y * gate[:, None, :] + res, 0.0)
    o_ref[...] = out.reshape(B, H, W, C).astype(o_ref.dtype)


# -------------------------------- wrappers -----------------------------------


def _fold_bn_into_conv(w_hwio, scale, shift, compute_dtype):
    """Fold inference BN scale into HWIO conv weights; reshape for im2col."""
    kh, kw, cin, cout = w_hwio.shape
    w = (w_hwio * scale.reshape(1, 1, 1, cout)).reshape(kh * kw * cin, cout)
    return w.astype(compute_dtype), shift.reshape(1, cout).astype(jnp.float32)


def residual_block_forward(x_nchw, params, *, compute_dtype=jnp.bfloat16,
                           batch_tile=1):
    """ResidualBlock forward (in_ch == out_ch, stride=1, downsample=None)."""
    x = jnp.transpose(x_nchw, (0, 2, 3, 1))     # NCHW -> NHWC
    N, H, W, C = x.shape
    assert N % batch_tile == 0, "batch_tile must divide the batch size"
    Cr = params["se_w1"].shape[-1]

    w1f, b1 = _fold_bn_into_conv(params["w_conv1"], params["bn1_scale"],
                                 params["bn1_shift"], compute_dtype)
    w2f, b2 = _fold_bn_into_conv(params["w_conv2"], params["bn2_scale"],
                                 params["bn2_shift"], compute_dtype)
    se_w1 = params["se_w1"].astype(jnp.float32)
    se_w2 = params["se_w2"].astype(jnp.float32)

    kern = functools.partial(_residual_block_kernel, H=H, W=W,
                             inv_hw=1.0 / float(H * W))
    bt = batch_tile
    out = pl.pallas_call(
        kern,
        grid=(N // bt,),
        in_specs=[
            pl.BlockSpec((bt, H, W, C), lambda n: (n, 0, 0, 0)),
            pl.BlockSpec((9 * C, C), lambda n: (0, 0)),
            pl.BlockSpec((1, C), lambda n: (0, 0)),
            pl.BlockSpec((9 * C, C), lambda n: (0, 0)),
            pl.BlockSpec((1, C), lambda n: (0, 0)),
            pl.BlockSpec((C, Cr), lambda n: (0, 0)),
            pl.BlockSpec((Cr, C), lambda n: (0, 0)),
        ],
        out_specs=pl.BlockSpec((bt, H, W, C), lambda n: (n, 0, 0, 0)),
        out_shape=jax.ShapeDtypeStruct((N, H, W, C), x_nchw.dtype),
        scratch_shapes=[
            pltpu.VMEM((bt, H + 2, W, C), compute_dtype),
            pltpu.VMEM((bt, H + 2, W, C), compute_dtype),
            pltpu.VMEM((bt * H * W, 9 * C), compute_dtype),
        ],
        compiler_params=pltpu.CompilerParams(
            dimension_semantics=("parallel",),
            # Conservative: safe on v5e/v6e and within v7x's 64 MiB/TC budget.
            vmem_limit_bytes=32 * 1024 * 1024,
        ),
    )(x.astype(compute_dtype), w1f, b1, w2f, b2, se_w1, se_w2)
    return jnp.transpose(out, (0, 3, 1, 2))     # NHWC -> NCHW


# ---------------------------- pure-JAX reference -----------------------------


def residual_block_reference(x_nchw, params):
    x = jnp.transpose(x_nchw, (0, 2, 3, 1))
    dn = ("NHWC", "HWIO", "NHWC")
    o = lax.conv_general_dilated(x, params["w_conv1"], (1, 1), "SAME",
                                 dimension_numbers=dn)
    o = o * params["bn1_scale"] + params["bn1_shift"]
    o = jnp.maximum(o, 0.0)
    o = lax.conv_general_dilated(o, params["w_conv2"], (1, 1), "SAME",
                                 dimension_numbers=dn)
    o = o * params["bn2_scale"] + params["bn2_shift"]
    pooled = o.mean(axis=(1, 2))
    y = jax.nn.sigmoid(jnp.maximum(pooled @ params["se_w1"], 0.0)
                       @ params["se_w2"])
    o = jnp.maximum(o * y[:, None, None, :] + x, 0.0)
    return jnp.transpose(o, (0, 3, 1, 2))


# ------------------------------------ main ------------------------------------

if __name__ == "__main__":
    # in_channels == out_channels, stride=1, downsample=None
    N, C, H, W = 2, 32, 8, 8
    REDUCTION = 16
    EPS = 1e-5

    keys = jax.random.split(jax.random.PRNGKey(0), 13)
    x = jax.random.normal(keys[0], (N, C, H, W), jnp.float32)

    # conv weights (HWIO), no bias
    w_conv1 = 0.1 * jax.random.normal(keys[1], (3, 3, C, C), jnp.float32)
    w_conv2 = 0.1 * jax.random.normal(keys[2], (3, 3, C, C), jnp.float32)

    # BatchNorm params (inference-mode, folded to affine)
    def make_bn(k_gamma, k_beta, k_mean, k_var):
        gamma = 1.0 + 0.1 * jax.random.normal(k_gamma, (C,), jnp.float32)
        beta = 0.1 * jax.random.normal(k_beta, (C,), jnp.float32)
        mean = 0.1 * jax.random.normal(k_mean, (C,), jnp.float32)
        var = 0.5 + jnp.abs(jax.random.normal(k_var, (C,), jnp.float32))
        scale = gamma * lax.rsqrt(var + EPS)
        shift = beta - mean * scale
        return scale, shift

    bn1_scale, bn1_shift = make_bn(keys[3], keys[4], keys[5], keys[6])
    bn2_scale, bn2_shift = make_bn(keys[7], keys[8], keys[9], keys[10])

    # SE block linear weights (no bias): fc1 (C -> C//r), fc2 (C//r -> C)
    se_w1 = 0.3 * jax.random.normal(keys[11], (C, C // REDUCTION), jnp.float32)
    se_w2 = 0.3 * jax.random.normal(keys[12], (C // REDUCTION, C), jnp.float32)

    params = dict(
        w_conv1=w_conv1, w_conv2=w_conv2,
        bn1_scale=bn1_scale, bn1_shift=bn1_shift,
        bn2_scale=bn2_scale, bn2_shift=bn2_shift,
        se_w1=se_w1, se_w2=se_w2,
    )

    ref = jax.block_until_ready(residual_block_reference(x, params))

    # Exact-path check: f32 MXU operands, one image per grid step
    # (grid length 2 -> even, shards across v7x's two TensorCores).
    run_f32 = jax.jit(functools.partial(residual_block_forward,
                                        compute_dtype=jnp.float32,
                                        batch_tile=1))
    out_f32 = jax.block_until_ready(run_f32(x, params))
    assert out_f32.shape == (N, C, H, W), out_f32.shape
    err_f32 = float(jnp.max(jnp.abs(out_f32 - ref)))
    assert jnp.allclose(out_f32, ref, atol=1e-2, rtol=1e-2), err_f32

    # Production default: bf16 MXU operands + batch-tiled grid step.
    run_bf16 = jax.jit(functools.partial(residual_block_forward,
                                         compute_dtype=jnp.bfloat16,
                                         batch_tile=2))
    out_bf16 = jax.block_until_ready(run_bf16(x, params))
    assert out_bf16.shape == (N, C, H, W), out_bf16.shape
    err_bf16 = float(jnp.max(jnp.abs(out_bf16 - ref)))
    assert jnp.allclose(out_bf16, ref, atol=1e-1, rtol=1e-1), err_bf16

    print("KERNEL_OK")
</pallas_src>

<mosaic_0001>
module attributes {stable_mosaic.version = 11 : i64} {
  func.func @_residual_block_kernel(%arg0: i32, %arg1: memref<1x8x8x32xf32, #tpu.memory_space<vmem>>, %arg2: memref<288x32xf32, #tpu.memory_space<vmem>>, %arg3: memref<1x32xf32, #tpu.memory_space<vmem>>, %arg4: memref<288x32xf32, #tpu.memory_space<vmem>>, %arg5: memref<1x32xf32, #tpu.memory_space<vmem>>, %arg6: memref<32x2xf32, #tpu.memory_space<vmem>>, %arg7: memref<2x32xf32, #tpu.memory_space<vmem>>, %arg8: memref<1x8x8x32xf32, #tpu.memory_space<vmem>>, %arg9: memref<1x10x8x32xf32, #tpu.memory_space<vmem>>, %arg10: memref<1x10x8x32xf32, #tpu.memory_space<vmem>>, %arg11: memref<64x288xf32, #tpu.memory_space<vmem>>) attributes {dimension_semantics = [#tpu.dimension_semantics<parallel>], iteration_bounds = array<i64: 2>, scalar_prefetch = 0 : i64, scratch_operands = 3 : i64, tpu.core_type = #tpu.core_type<tc>, window_params = [{transform_indices = @transform_0, window_bounds = array<i64: 1, 8, 8, 32>}, {pipeline_mode = #tpu.pipeline_mode<synchronous>, transform_indices = @transform_1, window_bounds = array<i64: 288, 32>}, {pipeline_mode = #tpu.pipeline_mode<synchronous>, transform_indices = @transform_2, window_bounds = array<i64: 1, 32>}, {pipeline_mode = #tpu.pipeline_mode<synchronous>, transform_indices = @transform_3, window_bounds = array<i64: 288, 32>}, {pipeline_mode = #tpu.pipeline_mode<synchronous>, transform_indices = @transform_4, window_bounds = array<i64: 1, 32>}, {pipeline_mode = #tpu.pipeline_mode<synchronous>, transform_indices = @transform_5, window_bounds = array<i64: 32, 2>}, {pipeline_mode = #tpu.pipeline_mode<synchronous>, transform_indices = @transform_6, window_bounds = array<i64: 2, 32>}, {transform_indices = @transform_7, window_bounds = array<i64: 1, 8, 8, 32>}]} {
    %cst = arith.constant 0.000000e+00 : f32
    %0 = vector.broadcast %cst : f32 to vector<1x1x8x32xf32>
    %c0 = arith.constant 0 : index
    %c0_0 = arith.constant 0 : index
    %c0_1 = arith.constant 0 : index
    %c0_2 = arith.constant 0 : index
    %1 = vector.load %arg9[%c0, %c0_0, %c0_1, %c0_2] : memref<1x10x8x32xf32, #tpu.memory_space<vmem>>, vector<1x1x8x32xf32>
    tpu.vector_store %arg9[%c0, %c0_0, %c0_1, %c0_2], %0 {strides = array<i32>} : memref<1x10x8x32xf32, #tpu.memory_space<vmem>>, vector<1x1x8x32xf32>,
    %c0_3 = arith.constant 0 : index
    %c9 = arith.constant 9 : index
    %c0_4 = arith.constant 0 : index
    %c0_5 = arith.constant 0 : index
    %2 = vector.load %arg9[%c0_3, %c9, %c0_4, %c0_5] : memref<1x10x8x32xf32, #tpu.memory_space<vmem>>, vector<1x1x8x32xf32>
    tpu.vector_store %arg9[%c0_3, %c9, %c0_4, %c0_5], %0 {strides = array<i32>} : memref<1x10x8x32xf32, #tpu.memory_space<vmem>>, vector<1x1x8x32xf32>,
    %c0_6 = arith.constant 0 : index
    %c0_7 = arith.constant 0 : index
    %c0_8 = arith.constant 0 : index
    %c0_9 = arith.constant 0 : index
    %3 = vector.load %arg10[%c0_6, %c0_7, %c0_8, %c0_9] : memref<1x10x8x32xf32, #tpu.memory_space<vmem>>, vector<1x1x8x32xf32>
    tpu.vector_store %arg10[%c0_6, %c0_7, %c0_8, %c0_9], %0 {strides = array<i32>} : memref<1x10x8x32xf32, #tpu.memory_space<vmem>>, vector<1x1x8x32xf32>,
    %c0_10 = arith.constant 0 : index
    %c9_11 = arith.constant 9 : index
    %c0_12 = arith.constant 0 : index
    %c0_13 = arith.constant 0 : index
    %4 = vector.load %arg10[%c0_10, %c9_11, %c0_12, %c0_13] : memref<1x10x8x32xf32, #tpu.memory_space<vmem>>, vector<1x1x8x32xf32>
    tpu.vector_store %arg10[%c0_10, %c9_11, %c0_12, %c0_13], %0 {strides = array<i32>} : memref<1x10x8x32xf32, #tpu.memory_space<vmem>>, vector<1x1x8x32xf32>,
    %c0_14 = arith.constant 0 : index
    %c0_15 = arith.constant 0 : index
    %c0_16 = arith.constant 0 : index
    %c0_17 = arith.constant 0 : index
    %5 = vector.load %arg1[%c0_14, %c0_15, %c0_16, %c0_17] : memref<1x8x8x32xf32, #tpu.memory_space<vmem>>, vector<1x8x8x32xf32>
    %c0_18 = arith.constant 0 : index
    %c1 = arith.constant 1 : index
    %c0_19 = arith.constant 0 : index
    %c0_20 = arith.constant 0 : index
    %6 = vector.load %arg9[%c0_18, %c1, %c0_19, %c0_20] : memref<1x10x8x32xf32, #tpu.memory_space<vmem>>, vector<1x8x8x32xf32>
    tpu.vector_store %arg9[%c0_18, %c1, %c0_19, %c0_20], %5 {strides = array<i32>} : memref<1x10x8x32xf32, #tpu.memory_space<vmem>>, vector<1x8x8x32xf32>,
    %7 = tpu.iota {dimensions = array<i32: 2>} : vector<1x8x8x32xi32>
    %c0_21 = arith.constant 0 : index
    %c0_22 = arith.constant 0 : index
    %c0_23 = arith.constant 0 : index
    %c0_24 = arith.constant 0 : index
    %8 = vector.load %arg9[%c0_21, %c0_22, %c0_23, %c0_24] : memref<1x10x8x32xf32, #tpu.memory_space<vmem>>, vector<1x8x8x32xf32>
    %c0_i32 = arith.constant 0 : i32
    %9 = vector.broadcast %c0_i32 : i32 to vector<1x8x8x32xi32>
    %10 = arith.cmpi eq, %7, %9 : vector<1x8x8x32xi32>
    %c1_i32 = arith.constant 1 : i32
    %11 = tpu.dynamic_rotate %8 by %c1_i32 dim 2 : vector<1x8x8x32xf32>, i32 -> vector<1x8x8x32xf32>
    %c0_i32_25 = arith.constant 0 : i32
    %12 = arith.sitofp %c0_i32_25 : i32 to f32
    %13 = vector.broadcast %12 : f32 to vector<1x8x8x32xf32>
    %14 = arith.select %10, %13, %11 : vector<1x8x8x32xi1>, vector<1x8x8x32xf32>
    %c7_i32 = arith.constant 7 : i32
    %15 = vector.broadcast %c7_i32 : i32 to vector<1x8x8x32xi32>
    %16 = arith.cmpi eq, %7, %15 : vector<1x8x8x32xi32>
    %c7_i32_26 = arith.constant 7 : i32
    %17 = tpu.dynamic_rotate %8 by %c7_i32_26 dim 2 : vector<1x8x8x32xf32>, i32 -> vector<1x8x8x32xf32>
    %c0_i32_27 = arith.constant 0 : i32
    %18 = arith.sitofp %c0_i32_27 : i32 to f32
    %19 = vector.broadcast %18 : f32 to vector<1x8x8x32xf32>
    %20 = arith.select %16, %19, %17 : vector<1x8x8x32xi1>, vector<1x8x8x32xf32>
    %21 = vector.shape_cast %14 : vector<1x8x8x32xf32> to vector<64x32xf32>
    %c0_28 = arith.constant 0 : index
    %c0_29 = arith.constant 0 : index
    %22 = vector.load %arg11[%c0_28, %c0_29] : memref<64x288xf32, #tpu.memory_space<vmem>>, vector<64x32xf32>
    tpu.vector_store %arg11[%c0_28, %c0_29], %21 {strides = array<i32>} : memref<64x288xf32, #tpu.memory_space<vmem>>, vector<64x32xf32>,
    %23 = vector.shape_cast %8 : vector<1x8x8x32xf32> to vector<64x32xf32>
    %c0_30 = arith.constant 0 : index
    %c32 = arith.constant 32 : index
    %24 = vector.load %arg11[%c0_30, %c32] : memref<64x288xf32, #tpu.memory_space<vmem>>, vector<64x32xf32>
    tpu.vector_store %arg11[%c0_30, %c32], %23 {strides = array<i32>} : memref<64x288xf32, #tpu.memory_space<vmem>>, vector<64x32xf32>,
    %25 = vector.shape_cast %20 : vector<1x8x8x32xf32> to vector<64x32xf32>
    %c0_31 = arith.constant 0 : index
    %c64 = arith.constant 64 : index
    %26 = vector.load %arg11[%c0_31, %c64] : memref<64x288xf32, #tpu.memory_space<vmem>>, vector<64x32xf32>
    tpu.vector_store %arg11[%c0_31, %c64], %25 {strides = array<i32>} : memref<64x288xf32, #tpu.memory_space<vmem>>, vector<64x32xf32>,
    %c0_32 = arith.constant 0 : index
    %c1_33 = arith.constant 1 : index
    %c0_34 = arith.constant 0 : index
    %c0_35 = arith.constant 0 : index
    %27 = vector.load %arg9[%c0_32, %c1_33, %c0_34, %c0_35] : memref<1x10x8x32xf32, #tpu.memory_space<vmem>>, vector<1x8x8x32xf32>
    %c0_i32_36 = arith.constant 0 : i32
    %28 = vector.broadcast %c0_i32_36 : i32 to vector<1x8x8x32xi32>
    %29 = arith.cmpi eq, %7, %28 : vector<1x8x8x32xi32>
    %c1_i32_37 = arith.constant 1 : i32
    %30 = tpu.dynamic_rotate %27 by %c1_i32_37 dim 2 : vector<1x8x8x32xf32>, i32 -> vector<1x8x8x32xf32>
    %c0_i32_38 = arith.constant 0 : i32
    %31 = arith.sitofp %c0_i32_38 : i32 to f32
    %32 = vector.broadcast %31 : f32 to vector<1x8x8x32xf32>
    %33 = arith.select %29, %32, %30 : vector<1x8x8x32xi1>, vector<1x8x8x32xf32>
    %c7_i32_39 = arith.constant 7 : i32
    %34 = vector.broadcast %c7_i32_39 : i32 to vector<1x8x8x32xi32>
    %35 = arith.cmpi eq, %7, %34 : vector<1x8x8x32xi32>
    %c7_i32_40 = arith.constant 7 : i32
    %36 = tpu.dynamic_rotate %27 by %c7_i32_40 dim 2 : vector<1x8x8x32xf32>, i32 -> vector<1x8x8x32xf32>
    %c0_i32_41 = arith.constant 0 : i32
    %37 = arith.sitofp %c0_i32_41 : i32 to f32
    %38 = vector.broadcast %37 : f32 to vector<1x8x8x32xf32>
    %39 = arith.select %35, %38, %36 : vector<1x8x8x32xi1>, vector<1x8x8x32xf32>
    %40 = vector.shape_cast %33 : vector<1x8x8x32xf32> to vector<64x32xf32>
    %c0_42 = arith.constant 0 : index
    %c96 = arith.constant 96 : index
    %41 = vector.load %arg11[%c0_42, %c96] : memref<64x288xf32, #tpu.memory_space<vmem>>, vector<64x32xf32>
    tpu.vector_store %arg11[%c0_42, %c96], %40 {strides = array<i32>} : memref<64x288xf32, #tpu.memory_space<vmem>>, vector<64x32xf32>,
    %42 = vector.shape_cast %27 : vector<1x8x8x32xf32> to vector<64x32xf32>
    %c0_43 = arith.constant 0 : index
    %c128 = arith.constant 128 : index
    %43 = vector.load %arg11[%c0_43, %c128] : memref<64x288xf32, #tpu.memory_space<vmem>>, vector<64x32xf32>
    tpu.vector_store %arg11[%c0_43, %c128], %42 {strides = array<i32>} : memref<64x288xf32, #tpu.memory_space<vmem>>, vector<64x32xf32>,
    %44 = vector.shape_cast %39 : vector<1x8x8x32xf32> to vector<64x32xf32>
    %c0_44 = arith.constant 0 : index
    %c160 = arith.constant 160 : index
    %45 = vector.load %arg11[%c0_44, %c160] : memref<64x288xf32, #tpu.memory_space<vmem>>, vector<64x32xf32>
    tpu.vector_store %arg11[%c0_44, %c160], %44 {strides = array<i32>} : memref<64x288xf32, #tpu.memory_space<vmem>>, vector<64x32xf32>,
    %c0_45 = arith.constant 0 : index
    %c2 = arith.constant 2 : index
    %c0_46 = arith.constant 0 : index
    %c0_47 = arith.constant 0 : index
    %46 = vector.load %arg9[%c0_45, %c2, %c0_46, %c0_47] : memref<1x10x8x32xf32, #tpu.memory_space<vmem>>, vector<1x8x8x32xf32>
    %c0_i32_48 = arith.constant 0 : i32
    %47 = vector.broadcast %c0_i32_48 : i32 to vector<1x8x8x32xi32>
    %48 = arith.cmpi eq, %7, %47 : vector<1x8x8x32xi32>
    %c1_i32_49 = arith.constant 1 : i32
    %49 = tpu.dynamic_rotate %46 by %c1_i32_49 dim 2 : vector<1x8x8x32xf32>, i32 -> vector<1x8x8x32xf32>
    %c0_i32_50 = arith.constant 0 : i32
    %50 = arith.sitofp %c0_i32_50 : i32 to f32
    %51 = vector.broadcast %50 : f32 to vector<1x8x8x32xf32>
    %52 = arith.select %48, %51, %49 : vector<1x8x8x32xi1>, vector<1x8x8x32xf32>
    %c7_i32_51 = arith.constant 7 : i32
    %53 = vector.broadcast %c7_i32_51 : i32 to vector<1x8x8x32xi32>
    %54 = arith.cmpi eq, %7, %53 : vector<1x8x8x32xi32>
    %c7_i32_52 = arith.constant 7 : i32
    %55 = tpu.dynamic_rotate %46 by %c7_i32_52 dim 2 : vector<1x8x8x32xf32>, i32 -> vector<1x8x8x32xf32>
    %c0_i32_53 = arith.constant 0 : i32
    %56 = arith.sitofp %c0_i32_53 : i32 to f32
    %57 = vector.broadcast %56 : f32 to vector<1x8x8x32xf32>
    %58 = arith.select %54, %57, %55 : vector<1x8x8x32xi1>, vector<1x8x8x32xf32>
    %59 = vector.shape_cast %52 : vector<1x8x8x32xf32> to vector<64x32xf32>
    %c0_54 = arith.constant 0 : index
    %c192 = arith.constant 192 : index
    %60 = vector.load %arg11[%c0_54, %c192] : memref<64x288xf32, #tpu.memory_space<vmem>>, vector<64x32xf32>
    tpu.vector_store %arg11[%c0_54, %c192], %59 {strides = array<i32>} : memref<64x288xf32, #tpu.memory_space<vmem>>, vector<64x32xf32>,
    %61 = vector.shape_cast %46 : vector<1x8x8x32xf32> to vector<64x32xf32>
    %c0_55 = arith.constant 0 : index
    %c224 = arith.constant 224 : index
    %62 = vector.load %arg11[%c0_55, %c224] : memref<64x288xf32, #tpu.memory_space<vmem>>, vector<64x32xf32>
    tpu.vector_store %arg11[%c0_55, %c224], %61 {strides = array<i32>} : memref<64x288xf32, #tpu.memory_space<vmem>>, vector<64x32xf32>,
    %63 = vector.shape_cast %58 : vector<1x8x8x32xf32> to vector<64x32xf32>
    %c0_56 = arith.constant 0 : index
    %c256 = arith.constant 256 : index
    %64 = vector.load %arg11[%c0_56, %c256] : memref<64x288xf32, #tpu.memory_space<vmem>>, vector<64x32xf32>
    tpu.vector_store %arg11[%c0_56, %c256], %63 {strides = array<i32>} : memref<64x288xf32, #tpu.memory_space<vmem>>, vector<64x32xf32>,
    %c0_57 = arith.constant 0 : index
    %c0_58 = arith.constant 0 : index
    %65 = vector.load %arg11[%c0_57, %c0_58] : memref<64x288xf32, #tpu.memory_space<vmem>>, vector<64x288xf32>
    %c0_59 = arith.constant 0 : index
    %c0_60 = arith.constant 0 : index
    %66 = vector.load %arg2[%c0_59, %c0_60] : memref<288x32xf32, #tpu.memory_space<vmem>>, vector<288x32xf32>
    %cst_61 = arith.constant dense<0.000000e+00> : vector<64x32xf32>
    %67 = tpu.matmul %65, %66, %cst_61 {dimension_numbers = #tpu.dot_dimension_numbers<[1], [0], [0], [1], [0, 0, 1, 1], [], []>} : vector<64x288xf32>, vector<288x32xf32>, vector<64x32xf32> -> vector<64x32xf32>
    %c0_62 = arith.constant 0 : index
    %c0_63 = arith.constant 0 : index
    %68 = vector.load %arg3[%c0_62, %c0_63] : memref<1x32xf32, #tpu.memory_space<vmem>>, vector<1x32xf32>
    %69 = vector.broadcast %68 : vector<1x32xf32> to vector<64x32xf32>
    %70 = arith.addf %67, %69 : vector<64x32xf32>
    %cst_64 = arith.constant 0.000000e+00 : f32
    %71 = vector.broadcast %cst_64 : f32 to vector<64x32xf32>
    %72 = arith.maximumf %70, %71 : vector<64x32xf32>
    %73 = vector.shape_cast %72 : vector<64x32xf32> to vector<1x8x8x32xf32>
    %c0_65 = arith.constant 0 : index
    %c1_66 = arith.constant 1 : index
    %c0_67 = arith.constant 0 : index
    %c0_68 = arith.constant 0 : index
    %74 = vector.load %arg10[%c0_65, %c1_66, %c0_67, %c0_68] : memref<1x10x8x32xf32, #tpu.memory_space<vmem>>, vector<1x8x8x32xf32>
    tpu.vector_store %arg10[%c0_65, %c1_66, %c0_67, %c0_68], %73 {strides = array<i32>} : memref<1x10x8x32xf32, #tpu.memory_space<vmem>>, vector<1x8x8x32xf32>,
    %c0_69 = arith.constant 0 : index
    %c0_70 = arith.constant 0 : index
    %c0_71 = arith.constant 0 : index
    %c0_72 = arith.constant 0 : index
    %75 = vector.load %arg10[%c0_69, %c0_70, %c0_71, %c0_72] : memref<1x10x8x32xf32, #tpu.memory_space<vmem>>, vector<1x8x8x32xf32>
    %c0_i32_73 = arith.constant 0 : i32
    %76 = vector.broadcast %c0_i32_73 : i32 to vector<1x8x8x32xi32>
    %77 = arith.cmpi eq, %7, %76 : vector<1x8x8x32xi32>
    %c1_i32_74 = arith.constant 1 : i32
    %78 = tpu.dynamic_rotate %75 by %c1_i32_74 dim 2 : vector<1x8x8x32xf32>, i32 -> vector<1x8x8x32xf32>
    %c0_i32_75 = arith.constant 0 : i32
    %79 = arith.sitofp %c0_i32_75 : i32 to f32
    %80 = vector.broadcast %79 : f32 to vector<1x8x8x32xf32>
    %81 = arith.select %77, %80, %78 : vector<1x8x8x32xi1>, vector<1x8x8x32xf32>
    %c7_i32_76 = arith.constant 7 : i32
    %82 = vector.broadcast %c7_i32_76 : i32 to vector<1x8x8x32xi32>
    %83 = arith.cmpi eq, %7, %82 : vector<1x8x8x32xi32>
    %c7_i32_77 = arith.constant 7 : i32
    %84 = tpu.dynamic_rotate %75 by %c7_i32_77 dim 2 : vector<1x8x8x32xf32>, i32 -> vector<1x8x8x32xf32>
    %c0_i32_78 = arith.constant 0 : i32
    %85 = arith.sitofp %c0_i32_78 : i32 to f32
    %86 = vector.broadcast %85 : f32 to vector<1x8x8x32xf32>
    %87 = arith.select %83, %86, %84 : vector<1x8x8x32xi1>, vector<1x8x8x32xf32>
    %88 = vector.shape_cast %81 : vector<1x8x8x32xf32> to vector<64x32xf32>
    %c0_79 = arith.constant 0 : index
    %c0_80 = arith.constant 0 : index
    %89 = vector.load %arg11[%c0_79, %c0_80] : memref<64x288xf32, #tpu.memory_space<vmem>>, vector<64x32xf32>
    tpu.vector_store %arg11[%c0_79, %c0_80], %88 {strides = array<i32>} : memref<64x288xf32, #tpu.memory_space<vmem>>, vector<64x32xf32>,
    %90 = vector.shape_cast %75 : vector<1x8x8x32xf32> to vector<64x32xf32>
    %c0_81 = arith.constant 0 : index
    %c32_82 = arith.constant 32 : index
    %91 = vector.load %arg11[%c0_81, %c32_82] : memref<64x288xf32, #tpu.memory_space<vmem>>, vector<64x32xf32>
    tpu.vector_store %arg11[%c0_81, %c32_82], %90 {strides = array<i32>} : memref<64x288xf32, #tpu.memory_space<vmem>>, vector<64x32xf32>,
    %92 = vector.shape_cast %87 : vector<1x8x8x32xf32> to vector<64x32xf32>
    %c0_83 = arith.constant 0 : index
    %c64_84 = arith.constant 64 : index
    %93 = vector.load %arg11[%c0_83, %c64_84] : memref<64x288xf32, #tpu.memory_space<vmem>>, vector<64x32xf32>
    tpu.vector_store %arg11[%c0_83, %c64_84], %92 {strides = array<i32>} : memref<64x288xf32, #tpu.memory_space<vmem>>, vector<64x32xf32>,
    %c0_85 = arith.constant 0 : index
    %c1_86 = arith.constant 1 : index
    %c0_87 = arith.constant 0 : index
    %c0_88 = arith.constant 0 : index
    %94 = vector.load %arg10[%c0_85, %c1_86, %c0_87, %c0_88] : memref<1x10x8x32xf32, #tpu.memory_space<vmem>>, vector<1x8x8x32xf32>
    %c0_i32_89 = arith.constant 0 : i32
    %95 = vector.broadcast %c0_i32_89 : i32 to vector<1x8x8x32xi32>
    %96 = arith.cmpi eq, %7, %95 : vector<1x8x8x32xi32>
    %c1_i32_90 = arith.constant 1 : i32
    %97 = tpu.dynamic_rotate %94 by %c1_i32_90 dim 2 : vector<1x8x8x32xf32>, i32 -> vector<1x8x8x32xf32>
    %c0_i32_91 = arith.constant 0 : i32
    %98 = arith.sitofp %c0_i32_91 : i32 to f32
    %99 = vector.broadcast %98 : f32 to vector<1x8x8x32xf32>
    %100 = arith.select %96, %99, %97 : vector<1x8x8x32xi1>, vector<1x8x8x32xf32>
    %c7_i32_92 = arith.constant 7 : i32
    %101 = vector.broadcast %c7_i32_92 : i32 to vector<1x8x8x32xi32>
    %102 = arith.cmpi eq, %7, %101 : vector<1x8x8x32xi32>
    %c7_i32_93 = arith.constant 7 : i32
    %103 = tpu.dynamic_rotate %94 by %c7_i32_93 dim 2 : vector<1x8x8x32xf32>, i32 -> vector<1x8x8x32xf32>
    %c0_i32_94 = arith.constant 0 : i32
    %104 = arith.sitofp %c0_i32_94 : i32 to f32
    %105 = vector.broadcast %104 : f32 to vector<1x8x8x32xf32>
    %106 = arith.select %102, %105, %103 : vector<1x8x8x32xi1>, vector<1x8x8x32xf32>
    %107 = vector.shape_cast %100 : vector<1x8x8x32xf32> to vector<64x32xf32>
    %c0_95 = arith.constant 0 : index
    %c96_96 = arith.constant 96 : index
    %108 = vector.load %arg11[%c0_95, %c96_96] : memref<64x288xf32, #tpu.memory_space<vmem>>, vector<64x32xf32>
    tpu.vector_store %arg11[%c0_95, %c96_96], %107 {strides = array<i32>} : memref<64x288xf32, #tpu.memory_space<vmem>>, vector<64x32xf32>,
    %109 = vector.shape_cast %94 : vector<1x8x8x32xf32> to vector<64x32xf32>
    %c0_97 = arith.constant 0 : index
    %c128_98 = arith.constant 128 : index
    %110 = vector.load %arg11[%c0_97, %c128_98] : memref<64x288xf32, #tpu.memory_space<vmem>>, vector<64x32xf32>
    tpu.vector_store %arg11[%c0_97, %c128_98], %109 {strides = array<i32>} : memref<64x288xf32, #tpu.memory_space<vmem>>, vector<64x32xf32>,
    %111 = vector.shape_cast %106 : vector<1x8x8x32xf32> to vector<64x32xf32>
    %c0_99 = arith.constant 0 : index
    %c160_100 = arith.constant 160 : index
    %112 = vector.load %arg11[%c0_99, %c160_100] : memref<64x288xf32, #tpu.memory_space<vmem>>, vector<64x32xf32>
    tpu.vector_store %arg11[%c0_99, %c160_100], %111 {strides = array<i32>} : memref<64x288xf32, #tpu.memory_space<vmem>>, vector<64x32xf32>,
    %c0_101 = arith.constant 0 : index
    %c2_102 = arith.constant 2 : index
    %c0_103 = arith.constant 0 : index
    %c0_104 = arith.constant 0 : index
    %113 = vector.load %arg10[%c0_101, %c2_102, %c0_103, %c0_104] : memref<1x10x8x32xf32, #tpu.memory_space<vmem>>, vector<1x8x8x32xf32>
    %c0_i32_105 = arith.constant 0 : i32
    %114 = vector.broadcast %c0_i32_105 : i32 to vector<1x8x8x32xi32>
    %115 = arith.cmpi eq, %7, %114 : vector<1x8x8x32xi32>
    %c1_i32_106 = arith.constant 1 : i32
    %116 = tpu.dynamic_rotate %113 by %c1_i32_106 dim 2 : vector<1x8x8x32xf32>, i32 -> vector<1x8x8x32xf32>
    %c0_i32_107 = arith.constant 0 : i32
    %117 = arith.sitofp %c0_i32_107 : i32 to f32
    %118 = vector.broadcast %117 : f32 to vector<1x8x8x32xf32>
    %119 = arith.select %115, %118, %116 : vector<1x8x8x32xi1>, vector<1x8x8x32xf32>
    %c7_i32_108 = arith.constant 7 : i32
    %120 = vector.broadcast %c7_i32_108 : i32 to vector<1x8x8x32xi32>
    %121 = arith.cmpi eq, %7, %120 : vector<1x8x8x32xi32>
    %c7_i32_109 = arith.constant 7 : i32
    %122 = tpu.dynamic_rotate %113 by %c7_i32_109 dim 2 : vector<1x8x8x32xf32>, i32 -> vector<1x8x8x32xf32>
    %c0_i32_110 = arith.constant 0 : i32
    %123 = arith.sitofp %c0_i32_110 : i32 to f32
    %124 = vector.broadcast %123 : f32 to vector<1x8x8x32xf32>
    %125 = arith.select %121, %124, %122 : vector<1x8x8x32xi1>, vector<1x8x8x32xf32>
    %126 = vector.shape_cast %119 : vector<1x8x8x32xf32> to vector<64x32xf32>
    %c0_111 = arith.constant 0 : index
    %c192_112 = arith.constant 192 : index
    %127 = vector.load %arg11[%c0_111, %c192_112] : memref<64x288xf32, #tpu.memory_space<vmem>>, vector<64x32xf32>
    tpu.vector_store %arg11[%c0_111, %c192_112], %126 {strides = array<i32>} : memref<64x288xf32, #tpu.memory_space<vmem>>, vector<64x32xf32>,
    %128 = vector.shape_cast %113 : vector<1x8x8x32xf32> to vector<64x32xf32>
    %c0_113 = arith.constant 0 : index
    %c224_114 = arith.constant 224 : index
    %129 = vector.load %arg11[%c0_113, %c224_114] : memref<64x288xf32, #tpu.memory_space<vmem>>, vector<64x32xf32>
    tpu.vector_store %arg11[%c0_113, %c224_114], %128 {strides = array<i32>} : memref<64x288xf32, #tpu.memory_space<vmem>>, vector<64x32xf32>,
    %130 = vector.shape_cast %125 : vector<1x8x8x32xf32> to vector<64x32xf32>
    %c0_115 = arith.constant 0 : index
    %c256_116 = arith.constant 256 : index
    %131 = vector.load %arg11[%c0_115, %c256_116] : memref<64x288xf32, #tpu.memory_space<vmem>>, vector<64x32xf32>
    tpu.vector_store %arg11[%c0_115, %c256_116], %130 {strides = array<i32>} : memref<64x288xf32, #tpu.memory_space<vmem>>, vector<64x32xf32>,
    %c0_117 = arith.constant 0 : index
    %c0_118 = arith.constant 0 : index
    %132 = vector.load %arg11[%c0_117, %c0_118] : memref<64x288xf32, #tpu.memory_space<vmem>>, vector<64x288xf32>
    %c0_119 = arith.constant 0 : index
    %c0_120 = arith.constant 0 : index
    %133 = vector.load %arg4[%c0_119, %c0_120] : memref<288x32xf32, #tpu.memory_space<vmem>>, vector<288x32xf32>
    %cst_121 = arith.constant dense<0.000000e+00> : vector<64x32xf32>
    %134 = tpu.matmul %132, %133, %cst_121 {dimension_numbers = #tpu.dot_dimension_numbers<[1], [0], [0], [1], [0, 0, 1, 1], [], []>} : vector<64x288xf32>, vector<288x32xf32>, vector<64x32xf32> -> vector<64x32xf32>
    %c0_122 = arith.constant 0 : index
    %c0_123 = arith.constant 0 : index
    %135 = vector.load %arg5[%c0_122, %c0_123] : memref<1x32xf32, #tpu.memory_space<vmem>>, vector<1x32xf32>
    %136 = vector.broadcast %135 : vector<1x32xf32> to vector<64x32xf32>
    %137 = arith.addf %134, %136 : vector<64x32xf32>
    %138 = vector.shape_cast %137 : vector<64x32xf32> to vector<1x64x32xf32>
    %cst_124 = arith.constant dense<0.000000e+00> : vector<1x32xf32>
    %139 = vector.multi_reduction <add>, %138, %cst_124 [1] : vector<1x64x32xf32> to vector<1x32xf32>
    %cst_125 = arith.constant 1.562500e-02 : f32
    %140 = vector.broadcast %cst_125 : f32 to vector<1x32xf32>
    %141 = arith.mulf %139, %140 : vector<1x32xf32>
    %c0_126 = arith.constant 0 : index
    %c0_127 = arith.constant 0 : index
    %142 = vector.load %arg6[%c0_126, %c0_127] : memref<32x2xf32, #tpu.memory_space<vmem>>, vector<32x2xf32>
    %cst_128 = arith.constant dense<0.000000e+00> : vector<1x2xf32>
    %143 = tpu.matmul %141, %142, %cst_128 {dimension_numbers = #tpu.dot_dimension_numbers<[1], [0], [0], [1], [0, 0, 1, 1], [], []>} : vector<1x32xf32>, vector<32x2xf32>, vector<1x2xf32> -> vector<1x2xf32>
    %cst_129 = arith.constant 0.000000e+00 : f32
    %144 = vector.broadcast %cst_129 : f32 to vector<1x2xf32>
    %145 = arith.maximumf %143, %144 : vector<1x2xf32>
    %c0_130 = arith.constant 0 : index
    %c0_131 = arith.constant 0 : index
    %146 = vector.load %arg7[%c0_130, %c0_131] : memref<2x32xf32, #tpu.memory_space<vmem>>, vector<2x32xf32>
    %cst_132 = arith.constant dense<0.000000e+00> : vector<1x32xf32>
    %147 = tpu.matmul %145, %146, %cst_132 {dimension_numbers = #tpu.dot_dimension_numbers<[1], [0], [0], [1], [0, 0, 1, 1], [], []>} : vector<1x2xf32>, vector<2x32xf32>, vector<1x32xf32> -> vector<1x32xf32>
    %148 = arith.negf %147 : vector<1x32xf32>
    %149 = math.exp %148 : vector<1x32xf32>
    %cst_133 = arith.constant 1.000000e+00 : f32
    %150 = vector.broadcast %cst_133 : f32 to vector<1x32xf32>
    %151 = arith.addf %150, %149 : vector<1x32xf32>
    %152 = arith.divf %150, %151 : vector<1x32xf32>
    %c0_134 = arith.constant 0 : index
    %c0_135 = arith.constant 0 : index
    %c0_136 = arith.constant 0 : index
    %c0_137 = arith.constant 0 : index
    %153 = vector.load %arg1[%c0_134, %c0_135, %c0_136, %c0_137] : memref<1x8x8x32xf32, #tpu.memory_space<vmem>>, vector<1x8x8x32xf32>
    %154 = vector.shape_cast %153 : vector<1x8x8x32xf32> to vector<1x64x32xf32>
    %155 = vector.shape_cast %152 : vector<1x32xf32> to vector<1x1x32xf32>
    %156 = vector.broadcast %155 : vector<1x1x32xf32> to vector<1x64x32xf32>
    %157 = arith.mulf %138, %156 : vector<1x64x32xf32>
    %158 = arith.addf %157, %154 : vector<1x64x32xf32>
    %cst_138 = arith.constant 0.000000e+00 : f32
    %159 = vector.broadcast %cst_138 : f32 to vector<1x64x32xf32>
    %160 = arith.maximumf %158, %159 : vector<1x64x32xf32>
    %161 = vector.shape_cast %160 : vector<1x64x32xf32> to vector<1x8x8x32xf32>
    %c0_139 = arith.constant 0 : index
    %c0_140 = arith.constant 0 : index
    %c0_141 = arith.constant 0 : index
    %c0_142 = arith.constant 0 : index
    %162 = vector.load %arg8[%c0_139, %c0_140, %c0_141, %c0_142] : memref<1x8x8x32xf32, #tpu.memory_space<vmem>>, vector<1x8x8x32xf32>
    tpu.vector_store %arg8[%c0_139, %c0_140, %c0_141, %c0_142], %161 {strides = array<i32>} : memref<1x8x8x32xf32, #tpu.memory_space<vmem>>, vector<1x8x8x32xf32>,
    return
  }
  func.func @transform_0(%arg0: i32) -> (i32, i32, i32, i32) {
    %c0_i32 = arith.constant 0 : i32
    %c0_i32_0 = arith.constant 0 : i32
    %c0_i32_1 = arith.constant 0 : i32
    %c0_i32_2 = arith.constant 0 : i32
    return %arg0, %c0_i32, %c0_i32_0, %c0_i32_1 : i32, i32, i32, i32
  }
  func.func @transform_1(%arg0: i32) -> (i32, i32) {
    %c0_i32 = arith.constant 0 : i32
    %c0_i32_0 = arith.constant 0 : i32
    %c0_i32_1 = arith.constant 0 : i32
    return %c0_i32, %c0_i32_0 : i32, i32
  }
  func.func @transform_2(%arg0: i32) -> (i32, i32) {
    %c0_i32 = arith.constant 0 : i32
    %c0_i32_0 = arith.constant 0 : i32
    %c0_i32_1 = arith.constant 0 : i32
    return %c0_i32, %c0_i32_0 : i32, i32
  }
  func.func @transform_3(%arg0: i32) -> (i32, i32) {
    %c0_i32 = arith.constant 0 : i32
    %c0_i32_0 = arith.constant 0 : i32
    %c0_i32_1 = arith.constant 0 : i32
    return %c0_i32, %c0_i32_0 : i32, i32
  }
  func.func @transform_4(%arg0: i32) -> (i32, i32) {
    %c0_i32 = arith.constant 0 : i32
    %c0_i32_0 = arith.constant 0 : i32
    %c0_i32_1 = arith.constant 0 : i32
    return %c0_i32, %c0_i32_0 : i32, i32
  }
  func.func @transform_5(%arg0: i32) -> (i32, i32) {
    %c0_i32 = arith.constant 0 : i32
    %c0_i32_0 = arith.constant 0 : i32
    %c0_i32_1 = arith.constant 0 : i32
    return %c0_i32, %c0_i32_0 : i32, i32
  }
  func.func @transform_6(%arg0: i32) -> (i32, i32) {
    %c0_i32 = arith.constant 0 : i32
    %c0_i32_0 = arith.constant 0 : i32
    %c0_i32_1 = arith.constant 0 : i32
    return %c0_i32, %c0_i32_0 : i32, i32
  }
  func.func @transform_7(%arg0: i32) -> (i32, i32, i32, i32) {
    %c0_i32 = arith.constant 0 : i32
    %c0_i32_0 = arith.constant 0 : i32
    %c0_i32_1 = arith.constant 0 : i32
    %c0_i32_2 = arith.constant 0 : i32
    return %arg0, %c0_i32, %c0_i32_0, %c0_i32_1 : i32, i32, i32, i32
  }
}

</mosaic_0001>

<llo_original>
// kernel: residual_block_forward.1
$region0: #{residual_block_forward.1}
  #allocation0 [shape = 'u32[]', space=smem, size = 0x4, offset = 0x4, fixed_abs, tag = 'smem constant byte address 0x4 - core index']
  #allocation1 [shape = 'u32[144,128]{1,0:T(1,128)}', space=vmem, size = 0x12000, scoped, tag = 'internal scratch']
  #allocation2 [shape = 'f32[1,10,8,32]{3,2,1,0:T(8,128)}', space=vmem, size = 0xa000, scoped, tag = 'scratch operand']
  #allocation3 [shape = 'f32[1,10,8,32]{3,2,1,0:T(8,128)}', space=vmem, size = 0xa000, scoped, tag = 'scratch operand']
  #allocation4 [shape = 'f32[64,288]{1,0:T(8,128)}', space=vmem, size = 0x18000, scoped, tag = 'scratch operand']
  %s0 = inlined_call_operand.vmem [shape: f32[2,8,8,32], index: 0, kind: input, shape index: {}]
  %s1 = inlined_call_operand.vmem [shape: f32[288,32], index: 1, kind: input, shape index: {}]
  %s2 = inlined_call_operand.vmem [shape: f32[1,32], index: 2, kind: input, shape index: {}]
  %s3 = inlined_call_operand.vmem [shape: f32[288,32], index: 3, kind: input, shape index: {}]
  %s4 = inlined_call_operand.vmem [shape: f32[1,32], index: 4, kind: input, shape index: {}]
  %s5 = inlined_call_operand.vmem [shape: f32[32,2], index: 5, kind: input, shape index: {}]
  %s6 = inlined_call_operand.vmem [shape: f32[2,32], index: 6, kind: input, shape index: {}]
  %s7 = inlined_call_operand.hbm [shape: f32[2,8,8,32], index: 7, kind: output, shape index: {}]
  %s8 = sld [smem:[#allocation0]]
  $region61: #{residual_block_forward.1} parent=0
    _
  %s10 = ssub.s32 1, %s8
  %s11 = scalar_select 0, %s10, %s8
  $region1: #{residual_block_forward.1} parent=0
    #allocation5 [shape = 'u8[65536]{0}', space=vmem, size = 0x10000, scoped, tag = 'output window, operand 0']
    #allocation6 [shape = 's32[2]{0}', space=sflag, size = 0x8, scoped, tag = 'scoped memory for residual_block_forward.1']
    %12 = vsyncpa [#allocation6], 0
    %s13 = scalar_lea.sflag [#allocation6], 1
    %14 = vsyncpa %s13, 0
    loop: start=0, step=1, limit=4
    $region2: #{residual_block_forward.1} parent=1 // loop_pre_header
      _
    $region3: #{residual_block_forward.1} parent=1 // loop_header
      %s16 = sphi 0, %s20
      %p17 = scmp.ge.s32.totalorder %s16, 4
      %s26 = sphi 0, %s28
      %s29 = sphi 0, %s26
      %s30 = sphi 0, %s29
      %s46 = sphi 0, %s30
      %s50 = sphi 0, %s50
      %s52 = sphi 0, %s50
      %s53 = sphi 0, %s52
      %s67 = sphi 0, %s53
      %s71 = sphi 0, %s71
      %s73 = sphi 0, %s71
      %s74 = sphi 0, %s73
      %s88 = sphi 0, %s74
      %s92 = sphi 0, %s92
      %s94 = sphi 0, %s92
      %s95 = sphi 0, %s94
      %s109 = sphi 0, %s95
      %s113 = sphi 0, %s113
      %s115 = sphi 0, %s113
      %s116 = sphi 0, %s115
      %s130 = sphi 0, %s116
      %s134 = sphi 0, %s134
      %s136 = sphi 0, %s134
      %s137 = sphi 0, %s136
      %s151 = sphi 0, %s137
      %s155 = sphi 0, %s155
      %s157 = sphi 0, %s155
      %s158 = sphi 0, %s157
      %s172 = sphi 0, %s158
      %s178 = sphi 0, %s180
      %s181 = sphi 0, %s178
      %s182 = sphi 0, %s181
      %s198 = sphi 0, %s182
    $region4: #{residual_block_forward.1} parent=1 // loop_header_branch
      %19 = sbr.rel (%p17) target = $region8
    $region5: #{residual_block_forward.1} parent=1 // loop_body
      %s21 = ssub.s32 %s16, 1
      %s22 = ssub.s32 %s16, 2
      %s23 = sadd.s32 %s16, 1
      %s24 = ssub.s32 %s16, %s23
      %p25 = scmp.eq.s32.totalorder %s24, 0
      %s27 = sadd.s32 %s26, 1
      %s28 = scalar_select %p25, %s26, %s27
      %p31 = pneg %p25
      %p32 = scmp.eq.s32.totalorder %s16, 1
      %p33 = por %p31, %p32
      %p34 = scmp.ne.s32.totalorder %s26, %s29
      %p35 = scmp.eq.s32.totalorder %s16, 0
      %p36 = por %p34, %p35
      %p37 = scmp.ne.s32.totalorder %s26, %s29
      %p38 = scmp.eq.s32.totalorder %s21, 1
      %p39 = por %p37, %p38
      %p40 = scmp.ne.s32.totalorder %s29, %s30
      %p41 = scmp.eq.s32.totalorder %s21, 0
      %p42 = por %p40, %p41
      %p43 = scmp.ne.s32.totalorder %s29, %s30
      %p44 = scmp.eq.s32.totalorder %s22, 1
      %p45 = por %p43, %p44
      %p47 = scmp.ne.s32.totalorder %s30, %s46
      %p48 = scmp.eq.s32.totalorder %s22, 0
      %p49 = por %p47, %p48
      %s51 = sadd.s32 %s50, 1
      %p54 = scmp.eq.s32.totalorder %s16, 1
      %p55 = scmp.ne.s32.totalorder %s50, %s52
      %p56 = scmp.eq.s32.totalorder %s16, 0
      %p57 = por %p55, %p56
      %p58 = scmp.ne.s32.totalorder %s50, %s52
      %p59 = scmp.eq.s32.totalorder %s21, 1
      %p60 = por %p58, %p59
      %p61 = scmp.ne.s32.totalorder %s52, %s53
      %p62 = scmp.eq.s32.totalorder %s21, 0
      %p63 = por %p61, %p62
      %p64 = scmp.ne.s32.totalorder %s52, %s53
      %p65 = scmp.eq.s32.totalorder %s22, 1
      %p66 = por %p64, %p65
      %p68 = scmp.ne.s32.totalorder %s53, %s67
      %p69 = scmp.eq.s32.totalorder %s22, 0
      %p70 = por %p68, %p69
      %s72 = sadd.s32 %s71, 1
      %p75 = scmp.eq.s32.totalorder %s16, 1
      %p76 = scmp.ne.s32.totalorder %s71, %s73
      %p77 = scmp.eq.s32.totalorder %s16, 0
      %p78 = por %p76, %p77
      %p79 = scmp.ne.s32.totalorder %s71, %s73
      %p80 = scmp.eq.s32.totalorder %s21, 1
      %p81 = por %p79, %p80
      %p82 = scmp.ne.s32.totalorder %s73, %s74
      %p83 = scmp.eq.s32.totalorder %s21, 0
      %p84 = por %p82, %p83
      %p85 = scmp.ne.s32.totalorder %s73, %s74
      %p86 = scmp.eq.s32.totalorder %s22, 1
      %p87 = por %p85, %p86
      %p89 = scmp.ne.s32.totalorder %s74, %s88
      %p90 = scmp.eq.s32.totalorder %s22, 0
      %p91 = por %p89, %p90
      %s93 = sadd.s32 %s92, 1
      %p96 = scmp.eq.s32.totalorder %s16, 1
      %p97 = scmp.ne.s32.totalorder %s92, %s94
      %p98 = scmp.eq.s32.totalorder %s16, 0
      %p99 = por %p97, %p98
      %p100 = scmp.ne.s32.totalorder %s92, %s94
      %p101 = scmp.eq.s32.totalorder %s21, 1
      %p102 = por %p100, %p101
      %p103 = scmp.ne.s32.totalorder %s94, %s95
      %p104 = scmp.eq.s32.totalorder %s21, 0
      %p105 = por %p103, %p104
      %p106 = scmp.ne.s32.totalorder %s94, %s95
      %p107 = scmp.eq.s32.totalorder %s22, 1
      %p108 = por %p106, %p107
      %p110 = scmp.ne.s32.totalorder %s95, %s109
      %p111 = scmp.eq.s32.totalorder %s22, 0
      %p112 = por %p110, %p111
      %s114 = sadd.s32 %s113, 1
      %p117 = scmp.eq.s32.totalorder %s16, 1
      %p118 = scmp.ne.s32.totalorder %s113, %s115
      %p119 = scmp.eq.s32.totalorder %s16, 0
      %p120 = por %p118, %p119
      %p121 = scmp.ne.s32.totalorder %s113, %s115
      %p122 = scmp.eq.s32.totalorder %s21, 1
      %p123 = por %p121, %p122
      %p124 = scmp.ne.s32.totalorder %s115, %s116
      %p125 = scmp.eq.s32.totalorder %s21, 0
      %p126 = por %p124, %p125
      %p127 = scmp.ne.s32.totalorder %s115, %s116
      %p128 = scmp.eq.s32.totalorder %s22, 1
      %p129 = por %p127, %p128
      %p131 = scmp.ne.s32.totalorder %s116, %s130
      %p132 = scmp.eq.s32.totalorder %s22, 0
      %p133 = por %p131, %p132
      %s135 = sadd.s32 %s134, 1
      %p138 = scmp.eq.s32.totalorder %s16, 1
      %p139 = scmp.ne.s32.totalorder %s134, %s136
      %p140 = scmp.eq.s32.totalorder %s16, 0
      %p141 = por %p139, %p140
      %p142 = scmp.ne.s32.totalorder %s134, %s136
      %p143 = scmp.eq.s32.totalorder %s21, 1
      %p144 = por %p142, %p143
      %p145 = scmp.ne.s32.totalorder %s136, %s137
      %p146 = scmp.eq.s32.totalorder %s21, 0
      %p147 = por %p145, %p146
      %p148 = scmp.ne.s32.totalorder %s136, %s137
      %p149 = scmp.eq.s32.totalorder %s22, 1
      %p150 = por %p148, %p149
      %p152 = scmp.ne.s32.totalorder %s137, %s151
      %p153 = scmp.eq.s32.totalorder %s22, 0
      %p154 = por %p152, %p153
      %s156 = sadd.s32 %s155, 1
      %p159 = scmp.eq.s32.totalorder %s16, 1
      %p160 = scmp.ne.s32.totalorder %s155, %s157
      %p161 = scmp.eq.s32.totalorder %s16, 0
      %p162 = por %p160, %p161
      %p163 = scmp.ne.s32.totalorder %s155, %s157
      %p164 = scmp.eq.s32.totalorder %s21, 1
      %p165 = por %p163, %p164
      %p166 = scmp.ne.s32.totalorder %s157, %s158
      %p167 = scmp.eq.s32.totalorder %s21, 0
      %p168 = por %p166, %p167
      %p169 = scmp.ne.s32.totalorder %s157, %s158
      %p170 = scmp.eq.s32.totalorder %s22, 1
      %p171 = por %p169, %p170
      %p173 = scmp.ne.s32.totalorder %s158, %s172
      %p174 = scmp.eq.s32.totalorder %s22, 0
      %p175 = por %p173, %p174
      %s176 = ssub.s32 %s16, %s23
      %p177 = scmp.eq.s32.totalorder %s176, 0
      %s179 = sadd.s32 %s178, 1
      %s180 = scalar_select %p177, %s178, %s179
      %p183 = pneg %p177
      %p184 = scmp.eq.s32.totalorder %s16, 1
      %p185 = por %p183, %p184
      %p186 = scmp.ne.s32.totalorder %s178, %s181
      %p187 = scmp.eq.s32.totalorder %s16, 0
      %p188 = por %p186, %p187
      %p189 = scmp.ne.s32.totalorder %s178, %s181
      %p190 = scmp.eq.s32.totalorder %s21, 1
      %p191 = por %p189, %p190
      %p192 = scmp.ne.s32.totalorder %s181, %s182
      %p193 = scmp.eq.s32.totalorder %s21, 0
      %p194 = por %p192, %p193
      %p195 = scmp.ne.s32.totalorder %s181, %s182
      %p196 = scmp.eq.s32.totalorder %s22, 1
      %p197 = por %p195, %p196
      %p199 = scmp.ne.s32.totalorder %s182, %s198
      %p200 = scmp.eq.s32.totalorder %s22, 0
      %p201 = por %p199, %p200
      %p202 = scmp.le.s32.totalorder 1, %s16
      %p203 = scmp.lt.s32.totalorder %s16, 3
      %p204 = pnand %p202, %p203
      %p205 = pneg %p204
      // Predicated region
      $region9: #{residual_block_forward.1} parent=5 // pred_check
        _
      $region10: #{residual_block_forward.1} parent=5 // pred_check_branch
        %207 = sbr.rel (%p204) target = $region12
      $region11: #{residual_block_forward.1} parent=5 // pred_region
        %s208 = ssub.s32 %s16, 1
        // Predicated region
        $region13: #{residual_block_forward.1} parent=11 // pred_check
          %p209 = pneg %p63
        $region14: #{residual_block_forward.1} parent=11 // pred_check_branch
          %211 = sbr.rel (%p209) target = $region16
        $region15: #{residual_block_forward.1} parent=11 // pred_region
          _
        $region16: #{residual_block_forward.1} parent=11 // pred_fallthru
          _
        // Predicated region
        $region17: #{residual_block_forward.1} parent=11 // pred_check
          %p212 = pneg %p84
        $region18: #{residual_block_forward.1} parent=11 // pred_check_branch
          %214 = sbr.rel (%p212) target = $region20
        $region19: #{residual_block_forward.1} parent=11 // pred_region
          _
        $region20: #{residual_block_forward.1} parent=11 // pred_fallthru
          _
        // Predicated region
        $region21: #{residual_block_forward.1} parent=11 // pred_check
          %p215 = pneg %p105
        $region22: #{residual_block_forward.1} parent=11 // pred_check_branch
          %217 = sbr.rel (%p215) target = $region24
        $region23: #{residual_block_forward.1} parent=11 // pred_region
          _
        $region24: #{residual_block_forward.1} parent=11 // pred_fallthru
          _
        // Predicated region
        $region25: #{residual_block_forward.1} parent=11 // pred_check
          %p218 = pneg %p126
        $region26: #{residual_block_forward.1} parent=11 // pred_check_branch
          %220 = sbr.rel (%p218) target = $region28
        $region27: #{residual_block_forward.1} parent=11 // pred_region
          _
        $region28: #{residual_block_forward.1} parent=11 // pred_fallthru
          _
        // Predicated region
        $region29: #{residual_block_forward.1} parent=11 // pred_check
          %p221 = pneg %p147
        $region30: #{residual_block_forward.1} parent=11 // pred_check_branch
          %223 = sbr.rel (%p221) target = $region32
        $region31: #{residual_block_forward.1} parent=11 // pred_region
          _
        $region32: #{residual_block_forward.1} parent=11 // pred_fallthru
          _
        // Predicated region
        $region33: #{residual_block_forward.1} parent=11 // pred_check
          %p224 = pneg %p168
        $region34: #{residual_block_forward.1} parent=11 // pred_check_branch
          %226 = sbr.rel (%p224) target = $region36
        $region35: #{residual_block_forward.1} parent=11 // pred_region
          _
        $region36: #{residual_block_forward.1} parent=11 // pred_fallthru
          _
      $region12: #{residual_block_forward.1} parent=5 // pred_fallthru
        _
      %p227 = scmp.lt.s32.totalorder %s16, 2
      // Predicated region
      $region37: #{residual_block_forward.1} parent=5 // pred_check
        %p228 = pneg %p227
      $region38: #{residual_block_forward.1} parent=5 // pred_check_branch
        %230 = sbr.rel (%p228) target = $region40
      $region39: #{residual_block_forward.1} parent=5 // pred_region
        // Predicated region
        $region41: #{residual_block_forward.1} parent=39 // pred_check
          %p231 = pneg %p36
        $region42: #{residual_block_forward.1} parent=39 // pred_check_branch
          %233 = sbr.rel (%p231) target = $region44
        $region43: #{residual_block_forward.1} parent=39 // pred_region
          %p234 = scmp.lt.s32.totalorder %s16, 1
          %s235 = scalar_select %p234, %s16, 1
          %s236 = smul.addr %s235, 8
          %s237 = smul.addr %s236, 8
          %s238 = scalar_lea.vmem %s0, %s237
        $region44: #{residual_block_forward.1} parent=39 // pred_fallthru
          _
      $region40: #{residual_block_forward.1} parent=5 // pred_fallthru
        _
      %p239 = scmp.le.s32.totalorder 1, %s16
      %p240 = scmp.lt.s32.totalorder %s16, 3
      %p241 = pnand %p239, %p240
      %p242 = pneg %p241
      // Predicated region
      $region45: #{residual_block_forward.1} parent=5 // pred_check
        _
      $region46: #{residual_block_forward.1} parent=5 // pred_check_branch
        %244 = sbr.rel (%p241) target = $region48
      $region47: #{residual_block_forward.1} parent=5 // pred_region
        %s245 = ssub.s32 %s16, 1
        %p246 = scmp.lt.s32.totalorder %s21, 1
        %s247 = scalar_select %p246, %s21, 1
        %s248 = smul.addr %s247, 8
        %s249 = smul.addr %s248, 8
        %s250 = scalar_lea.vmem %s0, %s249
        %p251 = pneg %p42
        %p252 = pneg %p39
        %p253 = pneg %p63
        %p254 = pneg %p60
        %p255 = pneg %p84
        %p256 = pneg %p81
        %p257 = pneg %p105
        %p258 = pneg %p102
        %p259 = pneg %p126
        %p260 = pneg %p123
        %p261 = pneg %p147
        %p262 = pneg %p144
        %p263 = pneg %p168
        %p264 = pneg %p165
        %p265 = pneg %p194
        %p266 = pneg %p191
        %s267 = sand.u32 %s181, 1
        %s268 = scalar_lea.sflag [#allocation6], %s267
        %s269 = sand.u32 %s181, 1
        %s270 = smul.addr %s269, 64
        %s271 = scalar_lea.vmem [#allocation5], %s270
        %p272 = scmp.lt.s32.totalorder %s21, 1
        %s273 = scalar_select %p272, %s21, 1
        %s274 = smul.addr %s273, 8
        %s275 = smul.addr %s274, 8
        %s276 = scalar_lea.vmem %s0, %s275
        %vm277 = vcmask 261120
        %278 = vst.msk [vmem:[#allocation2] sm:$0xff] %vm277, 0.0
        %s279 = scalar_lea.vmem [#allocation2], 72
        %280 = vst.msk [vmem:[%s279] sm:$0xff] %vm277, 0.0
        %281 = vst.msk [vmem:[#allocation3] sm:$0xff] %vm277, 0.0
        %s282 = scalar_lea.vmem [#allocation3], 72
        %283 = vst.msk [vmem:[%s282] sm:$0xff] %vm277, 0.0
        %v284 = vld [vmem:[%s276] sm:$0xff]
        %v285 = vld [vmem:[%s276 + $0x8] sm:$0xff]
        %v286 = vld [vmem:[%s276 + $0x10] sm:$0xff]
        %v287 = vld [vmem:[%s276 + $0x18] sm:$0xff]
        %v288 = vld [vmem:[%s276 + $0x20] sm:$0xff]
        %v289 = vld [vmem:[%s276 + $0x28] sm:$0xff]
        %v290 = vld [vmem:[%s276 + $0x30] sm:$0xff]
        %v291 = vld [vmem:[%s276 + $0x38] sm:$0xff]
        %s292 = scalar_lea.vmem [#allocation2], 8
        %293 = vst.msk [vmem:[%s292] sm:$0xff] %vm277, %v284
        %294 = vst.msk [vmem:[%s292 + $0x8] sm:$0xff] %vm277, %v285
        %295 = vst.msk [vmem:[%s292 + $0x10] sm:$0xff] %vm277, %v286
        %296 = vst.msk [vmem:[%s292 + $0x18] sm:$0xff] %vm277, %v287
        %297 = vst.msk [vmem:[%s292 + $0x20] sm:$0xff] %vm277, %v288
        %298 = vst.msk [vmem:[%s292 + $0x28] sm:$0xff] %vm277, %v289
        %299 = vst.msk [vmem:[%s292 + $0x30] sm:$0xff] %vm277, %v290
        %300 = vst.msk [vmem:[%s292 + $0x38] sm:$0xff] %vm277, %v291
        %v301 = vlaneseq
        %v302 = vshrl.u32 %v301, 7
        %v303 = vld [vmem:[#allocation2] sm:$0xff]
        %v304 = vld [vmem:[#allocation2 + $0x8] sm:$0xff]
        %v305 = vld [vmem:[#allocation2 + $0x10] sm:$0xff]
        %v306 = vld [vmem:[#allocation2 + $0x18] sm:$0xff]
        %v307 = vld [vmem:[#allocation2 + $0x20] sm:$0xff]
        %v308 = vld [vmem:[#allocation2 + $0x28] sm:$0xff]
        %v309 = vld [vmem:[#allocation2 + $0x30] sm:$0xff]
        %v310 = vld [vmem:[#allocation2 + $0x38] sm:$0xff]
        %vm311 = vcmp.eq.s32.totalorder %v302, 0
        %v312 = vrot.slane %v303, 7
        %v313 = vrot.slane %v304, 7
        %v314 = vrot.slane %v305, 7
        %v315 = vrot.slane %v306, 7
        %v316 = vrot.slane %v307, 7
        %v317 = vrot.slane %v308, 7
        %v318 = vrot.slane %v309, 7
        %v319 = vrot.slane %v310, 7
        %v320 = vsel %vm311, 0.0, %v312
        %v321 = vsel %vm311, 0.0, %v313
        %v322 = vsel %vm311, 0.0, %v314
        %v323 = vsel %vm311, 0.0, %v315
        %v324 = vsel %vm311, 0.0, %v316
        %v325 = vsel %vm311, 0.0, %v317
        %v326 = vsel %vm311, 0.0, %v318
        %v327 = vsel %vm311, 0.0, %v319
        %vm328 = vcmp.eq.s32.totalorder %v302, 7
        %v329 = vrot.slane %v303, 1
        %v330 = vrot.slane %v304, 1
        %v331 = vrot.slane %v305, 1
        %v332 = vrot.slane %v306, 1
        %v333 = vrot.slane %v307, 1
        %v334 = vrot.slane %v308, 1
        %v335 = vrot.slane %v309, 1
        %v336 = vrot.slane %v310, 1
        %v337 = vsel %vm328, 0.0, %v329
        %v338 = vsel %vm328, 0.0, %v330
        %v339 = vsel %vm328, 0.0, %v331
        %v340 = vsel %vm328, 0.0, %v332
        %v341 = vsel %vm328, 0.0, %v333
        %v342 = vsel %vm328, 0.0, %v334
        %v343 = vsel %vm328, 0.0, %v335
        %v344 = vsel %vm328, 0.0, %v336
        %345 = vst.msk [vmem:[#allocation4] sm:$0xff] %vm277, %v320
        %346 = vst.msk [vmem:[#allocation4 + $0x18] sm:$0xff] %vm277, %v321
        %347 = vst.msk [vmem:[#allocation4 + $0x30] sm:$0xff] %vm277, %v322
        %348 = vst.msk [vmem:[#allocation4 + $0x48] sm:$0xff] %vm277, %v323
        %349 = vst.msk [vmem:[#allocation4 + $0x60] sm:$0xff] %vm277, %v324
        %350 = vst.msk [vmem:[#allocation4 + $0x78] sm:$0xff] %vm277, %v325
        %351 = vst.msk [vmem:[#allocation4 + $0x90] sm:$0xff] %vm277, %v326
        %352 = vst.msk [vmem:[#allocation4 + $0xa8] sm:$0xff] %vm277, %v327
        %361 = vrot.lane.b32.xlu0 %v303, 32
        %v362 = vpop.permute.xlu0 %361
        %363 = vrot.lane.b32.xlu0 %v304, 32
        %v364 = vpop.permute.xlu0 %363
        %365 = vrot.lane.b32.xlu0 %v305, 32
        %v366 = vpop.permute.xlu0 %365
        %367 = vrot.lane.b32.xlu0 %v306, 32
        %v368 = vpop.permute.xlu0 %367
        %369 = vrot.lane.b32.xlu0 %v307, 32
        %v370 = vpop.permute.xlu0 %369
        %371 = vrot.lane.b32.xlu0 %v308, 32
        %v372 = vpop.permute.xlu0 %371
        %373 = vrot.lane.b32.xlu0 %v309, 32
        %v374 = vpop.permute.xlu0 %373
        %375 = vrot.lane.b32.xlu0 %v310, 32
        %v376 = vpop.permute.xlu0 %375
        %vm385 = vcmask 523520
        %386 = vst.msk [vmem:[#allocation4] sm:$0xff] %vm385, %v362
        %387 = vst.msk [vmem:[#allocation4 + $0x18] sm:$0xff] %vm385, %v364
        %388 = vst.msk [vmem:[#allocation4 + $0x30] sm:$0xff] %vm385, %v366
        %389 = vst.msk [vmem:[#allocation4 + $0x48] sm:$0xff] %vm385, %v368
        %390 = vst.msk [vmem:[#allocation4 + $0x60] sm:$0xff] %vm385, %v370
        %391 = vst.msk [vmem:[#allocation4 + $0x78] sm:$0xff] %vm385, %v372
        %392 = vst.msk [vmem:[#allocation4 + $0x90] sm:$0xff] %vm385, %v374
        %393 = vst.msk [vmem:[#allocation4 + $0xa8] sm:$0xff] %vm385, %v376
        %402 = vrot.lane.b32.xlu0 %v337, 64
        %v403 = vpop.permute.xlu0 %402
        %404 = vrot.lane.b32.xlu0 %v338, 64
        %v405 = vpop.permute.xlu0 %404
        %406 = vrot.lane.b32.xlu0 %v339, 64
        %v407 = vpop.permute.xlu0 %406
        %408 = vrot.lane.b32.xlu0 %v340, 64
        %v409 = vpop.permute.xlu0 %408
        %410 = vrot.lane.b32.xlu0 %v341, 64
        %v411 = vpop.permute.xlu0 %410
        %412 = vrot.lane.b32.xlu0 %v342, 64
        %v413 = vpop.permute.xlu0 %412
        %414 = vrot.lane.b32.xlu0 %v343, 64
        %v415 = vpop.permute.xlu0 %414
        %416 = vrot.lane.b32.xlu0 %v344, 64
        %v417 = vpop.permute.xlu0 %416
        %vm426 = vcmask 785920
        %427 = vst.msk [vmem:[#allocation4] sm:$0xff] %vm426, %v403
        %428 = vst.msk [vmem:[#allocation4 + $0x18] sm:$0xff] %vm426, %v405
        %429 = vst.msk [vmem:[#allocation4 + $0x30] sm:$0xff] %vm426, %v407
        %430 = vst.msk [vmem:[#allocation4 + $0x48] sm:$0xff] %vm426, %v409
        %431 = vst.msk [vmem:[#allocation4 + $0x60] sm:$0xff] %vm426, %v411
        %432 = vst.msk [vmem:[#allocation4 + $0x78] sm:$0xff] %vm426, %v413
        %433 = vst.msk [vmem:[#allocation4 + $0x90] sm:$0xff] %vm426, %v415
        %434 = vst.msk [vmem:[#allocation4 + $0xa8] sm:$0xff] %vm426, %v417
        %v435 = vld [vmem:[%s292] sm:$0xff]
        %v436 = vld [vmem:[%s292 + $0x8] sm:$0xff]
        %v437 = vld [vmem:[%s292 + $0x10] sm:$0xff]
        %v438 = vld [vmem:[%s292 + $0x18] sm:$0xff]
        %v439 = vld [vmem:[%s292 + $0x20] sm:$0xff]
        %v440 = vld [vmem:[%s292 + $0x28] sm:$0xff]
        %v441 = vld [vmem:[%s292 + $0x30] sm:$0xff]
        %v442 = vld [vmem:[%s292 + $0x38] sm:$0xff]
        %v443 = vrot.slane %v435, 7
        %v444 = vrot.slane %v436, 7
        %v445 = vrot.slane %v437, 7
        %v446 = vrot.slane %v438, 7
        %v447 = vrot.slane %v439, 7
        %v448 = vrot.slane %v440, 7
        %v449 = vrot.slane %v441, 7
        %v450 = vrot.slane %v442, 7
        %v451 = vsel %vm311, 0.0, %v443
        %v452 = vsel %vm311, 0.0, %v444
        %v453 = vsel %vm311, 0.0, %v445
        %v454 = vsel %vm311, 0.0, %v446
        %v455 = vsel %vm311, 0.0, %v447
        %v456 = vsel %vm311, 0.0, %v448
        %v457 = vsel %vm311, 0.0, %v449
        %v458 = vsel %vm311, 0.0, %v450
        %v459 = vrot.slane %v435, 1
        %v460 = vrot.slane %v436, 1
        %v461 = vrot.slane %v437, 1
        %v462 = vrot.slane %v438, 1
        %v463 = vrot.slane %v439, 1
        %v464 = vrot.slane %v440, 1
        %v465 = vrot.slane %v441, 1
        %v466 = vrot.slane %v442, 1
        %v467 = vsel %vm328, 0.0, %v459
        %v468 = vsel %vm328, 0.0, %v460
        %v469 = vsel %vm328, 0.0, %v461
        %v470 = vsel %vm328, 0.0, %v462
        %v471 = vsel %vm328, 0.0, %v463
        %v472 = vsel %vm328, 0.0, %v464
        %v473 = vsel %vm328, 0.0, %v465
        %v474 = vsel %vm328, 0.0, %v466
        %483 = vrot.lane.b32.xlu0 %v451, 96
        %v484 = vpop.permute.xlu0 %483
        %485 = vrot.lane.b32.xlu0 %v452, 96
        %v486 = vpop.permute.xlu0 %485
        %487 = vrot.lane.b32.xlu0 %v453, 96
        %v488 = vpop.permute.xlu0 %487
        %489 = vrot.lane.b32.xlu0 %v454, 96
        %v490 = vpop.permute.xlu0 %489
        %491 = vrot.lane.b32.xlu0 %v455, 96
        %v492 = vpop.permute.xlu0 %491
        %493 = vrot.lane.b32.xlu0 %v456, 96
        %v494 = vpop.permute.xlu0 %493
        %495 = vrot.lane.b32.xlu0 %v457, 96
        %v496 = vpop.permute.xlu0 %495
        %497 = vrot.lane.b32.xlu0 %v458, 96
        %v498 = vpop.permute.xlu0 %497
        %vm507 = vcmask 1048320
        %508 = vst.msk [vmem:[#allocation4] sm:$0xff] %vm507, %v484
        %509 = vst.msk [vmem:[#allocation4 + $0x18] sm:$0xff] %vm507, %v486
        %510 = vst.msk [vmem:[#allocation4 + $0x30] sm:$0xff] %vm507, %v488
        %511 = vst.msk [vmem:[#allocation4 + $0x48] sm:$0xff] %vm507, %v490
        %512 = vst.msk [vmem:[#allocation4 + $0x60] sm:$0xff] %vm507, %v492
        %513 = vst.msk [vmem:[#allocation4 + $0x78] sm:$0xff] %vm507, %v494
        %514 = vst.msk [vmem:[#allocation4 + $0x90] sm:$0xff] %vm507, %v496
        %515 = vst.msk [vmem:[#allocation4 + $0xa8] sm:$0xff] %vm507, %v498
        %516 = vst.msk [vmem:[#allocation4 + $0x8] sm:$0xff] %vm277, %v435
        %517 = vst.msk [vmem:[#allocation4 + $0x20] sm:$0xff] %vm277, %v436
        %518 = vst.msk [vmem:[#allocation4 + $0x38] sm:$0xff] %vm277, %v437
        %519 = vst.msk [vmem:[#allocation4 + $0x50] sm:$0xff] %vm277, %v438
        %520 = vst.msk [vmem:[#allocation4 + $0x68] sm:$0xff] %vm277, %v439
        %521 = vst.msk [vmem:[#allocation4 + $0x80] sm:$0xff] %vm277, %v440
        %522 = vst.msk [vmem:[#allocation4 + $0x98] sm:$0xff] %vm277, %v441
        %523 = vst.msk [vmem:[#allocation4 + $0xb0] sm:$0xff] %vm277, %v442
        %532 = vrot.lane.b32.xlu0 %v467, 32
        %v533 = vpop.permute.xlu0 %532
        %534 = vrot.lane.b32.xlu0 %v468, 32
        %v535 = vpop.permute.xlu0 %534
        %536 = vrot.lane.b32.xlu0 %v469, 32
        %v537 = vpop.permute.xlu0 %536
        %538 = vrot.lane.b32.xlu0 %v470, 32
        %v539 = vpop.permute.xlu0 %538
        %540 = vrot.lane.b32.xlu0 %v471, 32
        %v541 = vpop.permute.xlu0 %540
        %542 = vrot.lane.b32.xlu0 %v472, 32
        %v543 = vpop.permute.xlu0 %542
        %544 = vrot.lane.b32.xlu0 %v473, 32
        %v545 = vpop.permute.xlu0 %544
        %546 = vrot.lane.b32.xlu0 %v474, 32
        %v547 = vpop.permute.xlu0 %546
        %556 = vst.msk [vmem:[#allocation4 + $0x8] sm:$0xff] %vm385, %v533
        %557 = vst.msk [vmem:[#allocation4 + $0x20] sm:$0xff] %vm385, %v535
        %558 = vst.msk [vmem:[#allocation4 + $0x38] sm:$0xff] %vm385, %v537
        %559 = vst.msk [vmem:[#allocation4 + $0x50] sm:$0xff] %vm385, %v539
        %560 = vst.msk [vmem:[#allocation4 + $0x68] sm:$0xff] %vm385, %v541
        %561 = vst.msk [vmem:[#allocation4 + $0x80] sm:$0xff] %vm385, %v543
        %562 = vst.msk [vmem:[#allocation4 + $0x98] sm:$0xff] %vm385, %v545
        %563 = vst.msk [vmem:[#allocation4 + $0xb0] sm:$0xff] %vm385, %v547
        %s564 = scalar_lea.vmem [#allocation2], 16
        %v565 = vld [vmem:[%s564] sm:$0xff]
        %v566 = vld [vmem:[%s564 + $0x8] sm:$0xff]
        %v567 = vld [vmem:[%s564 + $0x10] sm:$0xff]
        %v568 = vld [vmem:[%s564 + $0x18] sm:$0xff]
        %v569 = vld [vmem:[%s564 + $0x20] sm:$0xff]
        %v570 = vld [vmem:[%s564 + $0x28] sm:$0xff]
        %v571 = vld [vmem:[%s564 + $0x30] sm:$0xff]
        %v572 = vld [vmem:[%s564 + $0x38] sm:$0xff]
        %v573 = vrot.slane %v565, 7
        %v574 = vrot.slane %v566, 7
        %v575 = vrot.slane %v567, 7
        %v576 = vrot.slane %v568, 7
        %v577 = vrot.slane %v569, 7
        %v578 = vrot.slane %v570, 7
        %v579 = vrot.slane %v571, 7
        %v580 = vrot.slane %v572, 7
        %v581 = vsel %vm311, 0.0, %v573
        %v582 = vsel %vm311, 0.0, %v574
        %v583 = vsel %vm311, 0.0, %v575
        %v584 = vsel %vm311, 0.0, %v576
        %v585 = vsel %vm311, 0.0, %v577
        %v586 = vsel %vm311, 0.0, %v578
        %v587 = vsel %vm311, 0.0, %v579
        %v588 = vsel %vm311, 0.0, %v580
        %v589 = vrot.slane %v565, 1
        %v590 = vrot.slane %v566, 1
        %v591 = vrot.slane %v567, 1
        %v592 = vrot.slane %v568, 1
        %v593 = vrot.slane %v569, 1
        %v594 = vrot.slane %v570, 1
        %v595 = vrot.slane %v571, 1
        %v596 = vrot.slane %v572, 1
        %v597 = vsel %vm328, 0.0, %v589
        %v598 = vsel %vm328, 0.0, %v590
        %v599 = vsel %vm328, 0.0, %v591
        %v600 = vsel %vm328, 0.0, %v592
        %v601 = vsel %vm328, 0.0, %v593
        %v602 = vsel %vm328, 0.0, %v594
        %v603 = vsel %vm328, 0.0, %v595
        %v604 = vsel %vm328, 0.0, %v596
        %613 = vrot.lane.b32.xlu0 %v581, 64
        %v614 = vpop.permute.xlu0 %613
        %615 = vrot.lane.b32.xlu0 %v582, 64
        %v616 = vpop.permute.xlu0 %615
        %617 = vrot.lane.b32.xlu0 %v583, 64
        %v618 = vpop.permute.xlu0 %617
        %619 = vrot.lane.b32.xlu0 %v584, 64
        %v620 = vpop.permute.xlu0 %619
        %621 = vrot.lane.b32.xlu0 %v585, 64
        %v622 = vpop.permute.xlu0 %621
        %623 = vrot.lane.b32.xlu0 %v586, 64
        %v624 = vpop.permute.xlu0 %623
        %625 = vrot.lane.b32.xlu0 %v587, 64
        %v626 = vpop.permute.xlu0 %625
        %627 = vrot.lane.b32.xlu0 %v588, 64
        %v628 = vpop.permute.xlu0 %627
        %637 = vst.msk [vmem:[#allocation4 + $0x8] sm:$0xff] %vm426, %v614
        %638 = vst.msk [vmem:[#allocation4 + $0x20] sm:$0xff] %vm426, %v616
        %639 = vst.msk [vmem:[#allocation4 + $0x38] sm:$0xff] %vm426, %v618
        %640 = vst.msk [vmem:[#allocation4 + $0x50] sm:$0xff] %vm426, %v620
        %641 = vst.msk [vmem:[#allocation4 + $0x68] sm:$0xff] %vm426, %v622
        %642 = vst.msk [vmem:[#allocation4 + $0x80] sm:$0xff] %vm426, %v624
        %643 = vst.msk [vmem:[#allocation4 + $0x98] sm:$0xff] %vm426, %v626
        %644 = vst.msk [vmem:[#allocation4 + $0xb0] sm:$0xff] %vm426, %v628
        %653 = vrot.lane.b32.xlu0 %v565, 96
        %v654 = vpop.permute.xlu0 %653
        %655 = vrot.lane.b32.xlu0 %v566, 96
        %v656 = vpop.permute.xlu0 %655
        %657 = vrot.lane.b32.xlu0 %v567, 96
        %v658 = vpop.permute.xlu0 %657
        %659 = vrot.lane.b32.xlu0 %v568, 96
        %v660 = vpop.permute.xlu0 %659
        %661 = vrot.lane.b32.xlu0 %v569, 96
        %v662 = vpop.permute.xlu0 %661
        %663 = vrot.lane.b32.xlu0 %v570, 96
        %v664 = vpop.permute.xlu0 %663
        %665 = vrot.lane.b32.xlu0 %v571, 96
        %v666 = vpop.permute.xlu0 %665
        %667 = vrot.lane.b32.xlu0 %v572, 96
        %v668 = vpop.permute.xlu0 %667
        %677 = vst.msk [vmem:[#allocation4 + $0x8] sm:$0xff] %vm507, %v654
        %678 = vst.msk [vmem:[#allocation4 + $0x20] sm:$0xff] %vm507, %v656
        %679 = vst.msk [vmem:[#allocation4 + $0x38] sm:$0xff] %vm507, %v658
        %680 = vst.msk [vmem:[#allocation4 + $0x50] sm:$0xff] %vm507, %v660
        %681 = vst.msk [vmem:[#allocation4 + $0x68] sm:$0xff] %vm507, %v662
        %682 = vst.msk [vmem:[#allocation4 + $0x80] sm:$0xff] %vm507, %v664
        %683 = vst.msk [vmem:[#allocation4 + $0x98] sm:$0xff] %vm507, %v666
        %684 = vst.msk [vmem:[#allocation4 + $0xb0] sm:$0xff] %vm507, %v668
        %685 = vst.msk [vmem:[#allocation4 + $0x10] sm:$0xff] %vm277, %v597
        %686 = vst.msk [vmem:[#allocation4 + $0x28] sm:$0xff] %vm277, %v598
        %687 = vst.msk [vmem:[#allocation4 + $0x40] sm:$0xff] %vm277, %v599
        %688 = vst.msk [vmem:[#allocation4 + $0x58] sm:$0xff] %vm277, %v600
        %689 = vst.msk [vmem:[#allocation4 + $0x70] sm:$0xff] %vm277, %v601
        %690 = vst.msk [vmem:[#allocation4 + $0x88] sm:$0xff] %vm277, %v602
        %691 = vst.msk [vmem:[#allocation4 + $0xa0] sm:$0xff] %vm277, %v603
        %692 = vst.msk [vmem:[#allocation4 + $0xb8] sm:$0xff] %vm277, %v604
        %v693 = vld [vmem:[#allocation4] sm:$0xff]
        %v694 = vld [vmem:[#allocation4 + $0x8] sm:$0xff]
        %v695 = vld [vmem:[#allocation4 + $0x10] sm:$0xff]
        %v696 = vld [vmem:[#allocation4 + $0x18] sm:$0xff]
        %v697 = vld [vmem:[#allocation4 + $0x20] sm:$0xff]
        %v698 = vld [vmem:[#allocation4 + $0x28] sm:$0xff]
        %v699 = vld [vmem:[#allocation4 + $0x30] sm:$0xff]
        %v700 = vld [vmem:[#allocation4 + $0x38] sm:$0xff]
        %v701 = vld [vmem:[#allocation4 + $0x40] sm:$0xff]
        %v702 = vld [vmem:[#allocation4 + $0x48] sm:$0xff]
        %v703 = vld [vmem:[#allocation4 + $0x50] sm:$0xff]
        %v704 = vld [vmem:[#allocation4 + $0x58] sm:$0xff]
        %v705 = vld [vmem:[#allocation4 + $0x60] sm:$0xff]
        %v706 = vld [vmem:[#allocation4 + $0x68] sm:$0xff]
        %v707 = vld [vmem:[#allocation4 + $0x70] sm:$0xff]
        %v708 = vld [vmem:[#allocation4 + $0x78] sm:$0xff]
        %v709 = vld [vmem:[#allocation4 + $0x80] sm:$0xff]
        %v710 = vld [vmem:[#allocation4 + $0x88] sm:$0xff]
        %v711 = vld [vmem:[#allocation4 + $0x90] sm:$0xff]
        %v712 = vld [vmem:[#allocation4 + $0x98] sm:$0xff]
        %v713 = vld [vmem:[#allocation4 + $0xa0] sm:$0xff]
        %v714 = vld [vmem:[#allocation4 + $0xa8] sm:$0xff]
        %v715 = vld [vmem:[#allocation4 + $0xb0] sm:$0xff]
        %v716 = vld [vmem:[#allocation4 + $0xb8] sm:$0xff]
        %v717 = vld [vmem:[%s1] sm:$0xff]
        %v718 = vld [vmem:[%s1 + $0x8] sm:$0xff]
        %v719 = vld [vmem:[%s1 + $0x10] sm:$0xff]
        %v720 = vld [vmem:[%s1 + $0x18] sm:$0xff]
        %v721 = vld [vmem:[%s1 + $0x20] sm:$0xff]
        %v722 = vld [vmem:[%s1 + $0x28] sm:$0xff]
        %v723 = vld [vmem:[%s1 + $0x30] sm:$0xff]
        %v724 = vld [vmem:[%s1 + $0x38] sm:$0xff]
        %v725 = vld [vmem:[%s1 + $0x40] sm:$0xff]
        %v726 = vld [vmem:[%s1 + $0x48] sm:$0xff]
        %v727 = vld [vmem:[%s1 + $0x50] sm:$0xff]
        %v728 = vld [vmem:[%s1 + $0x58] sm:$0xff]
        %v729 = vld [vmem:[%s1 + $0x60] sm:$0xff]
        %v730 = vld [vmem:[%s1 + $0x68] sm:$0xff]
        %v731 = vld [vmem:[%s1 + $0x70] sm:$0xff]
        %v732 = vld [vmem:[%s1 + $0x78] sm:$0xff]
        %v733 = vld [vmem:[%s1 + $0x80] sm:$0xff]
        %v734 = vld [vmem:[%s1 + $0x88] sm:$0xff]
        %v735 = vld [vmem:[%s1 + $0x90] sm:$0xff]
        %v736 = vld [vmem:[%s1 + $0x98] sm:$0xff]
        %v737 = vld [vmem:[%s1 + $0xa0] sm:$0xff]
        %v738 = vld [vmem:[%s1 + $0xa8] sm:$0xff]
        %v739 = vld [vmem:[%s1 + $0xb0] sm:$0xff]
        %v740 = vld [vmem:[%s1 + $0xb8] sm:$0xff]
        %v741 = vld [vmem:[%s1 + $0xc0] sm:$0xff]
        %v742 = vld [vmem:[%s1 + $0xc8] sm:$0xff]
        %v743 = vld [vmem:[%s1 + $0xd0] sm:$0xff]
        %v744 = vld [vmem:[%s1 + $0xd8] sm:$0xff]
        %v745 = vld [vmem:[%s1 + $0xe0] sm:$0xff]
        %v746 = vld [vmem:[%s1 + $0xe8] sm:$0xff]
        %v747 = vld [vmem:[%s1 + $0xf0] sm:$0xff]
        %v748 = vld [vmem:[%s1 + $0xf8] sm:$0xff]
        %v749 = vld [vmem:[%s1 + $0x100] sm:$0xff]
        %v750 = vld [vmem:[%s1 + $0x108] sm:$0xff]
        %v751 = vld [vmem:[%s1 + $0x110] sm:$0xff]
        %v752 = vld [vmem:[%s1 + $0x118] sm:$0xff]
        %v753 = vld [vmem:[%s2] sm:$0x1]
        %v755 = vlaneseq
        %v756 = vshrl.u32 %v755, 7
        %v757 = vsub.s32 0, %v756
        %v758 = vrot.slane %v753, %v757
        %v761 = vsel %vm277, %v695, 0
        %v764 = vsel %vm277, %v698, 0
        %v767 = vsel %vm277, %v701, 0
        %v770 = vsel %vm277, %v704, 0
        %v773 = vsel %vm277, %v707, 0
        %v776 = vsel %vm277, %v710, 0
        %v779 = vsel %vm277, %v713, 0
        %v782 = vsel %vm277, %v716, 0
        %784 = vmatprep.subr.mxu0 0.0
        %785 = vmatpush1.msra.mxu0 %v717
        %786 = vmatprep.subr.mxu0 0.0
        %787 = vmatpush1.msra.mxu0 %v718
        %788 = vmatprep.subr.mxu0 0.0
        %789 = vmatpush1.msra.mxu0 %v719
        %790 = vmatprep.subr.mxu0 0.0
        %791 = vmatpush1.msra.mxu0 %v720
        %792 = vmatprep.subr.mxu0 0.0
        %793 = vmatpush1.msra.mxu0 %v721
        %794 = vmatprep.subr.mxu0 0.0
        %795 = vmatpush1.msra.mxu0 %v722
        %796 = vmatprep.subr.mxu0 0.0
        %797 = vmatpush1.msra.mxu0 %v723
        %798 = vmatprep.subr.mxu0 0.0
        %799 = vmatpush1.msra.mxu0 %v724
        %800 = vmatprep.subr.mxu0 0.0
        %801 = vmatpush1.msra.mxu0 %v725
        %802 = vmatprep.subr.mxu0 0.0
        %803 = vmatpush1.msra.mxu0 %v726
        %804 = vmatprep.subr.mxu0 0.0
        %805 = vmatpush1.msra.mxu0 %v727
        %806 = vmatprep.subr.mxu0 0.0
        %807 = vmatpush1.msra.mxu0 %v728
        %808 = vmatprep.subr.mxu0 0.0
        %809 = vmatpush1.msra.mxu0 %v729
        %810 = vmatprep.subr.mxu0 0.0
        %811 = vmatpush1.msra.mxu0 %v730
        %812 = vmatprep.subr.mxu0 0.0
        %813 = vmatpush1.msra.mxu0 %v731
        %814 = vmatprep.subr.mxu0 0.0
        %815 = vmatpush1.msra.mxu0 %v732
        %816 = vmatprep.subr.mxu0 0.0
        %817 = vmatpush1.msra.mxu0 %v733
        %818 = vmatprep.subr.mxu0 0.0
        %819 = vmatpush1.msra.mxu0 %v734
        %820 = vmatprep.subr.mxu0 0.0
        %821 = vmatpush1.msra.mxu0 %v735
        %822 = vmatprep.subr.mxu0 0.0
        %823 = vmatpush1.msra.mxu0 %v736
        %824 = vmatprep.subr.mxu0 0.0
        %825 = vmatpush1.msra.mxu0 %v737
        %826 = vmatprep.subr.mxu0 0.0
        %827 = vmatpush1.msra.mxu0 %v738
        %828 = vmatprep.subr.mxu0 0.0
        %829 = vmatpush1.msra.mxu0 %v739
        %830 = vmatprep.subr.mxu0 0.0
        %831 = vmatpush1.msra.mxu0 %v740
        %832 = vmatprep.subr.mxu0 0.0
        %833 = vmatpush1.msra.mxu0 %v741
        %834 = vmatprep.subr.mxu0 0.0
        %835 = vmatpush1.msra.mxu0 %v742
        %836 = vmatprep.subr.mxu0 0.0
        %837 = vmatpush1.msra.mxu0 %v743
        %838 = vmatprep.subr.mxu0 0.0
        %839 = vmatpush1.msra.mxu0 %v744
        %840 = vmatprep.subr.mxu0 0.0
        %841 = vmatpush1.msra.mxu0 %v745
        %842 = vmatprep.subr.mxu0 0.0
        %843 = vmatpush1.msra.mxu0 %v746
        %844 = vmatprep.subr.mxu0 0.0
        %845 = vmatpush1.msra.mxu0 %v747
        %846 = vmatprep.subr.mxu0 0.0
        %847 = vmatpush1.msra.mxu0 %v748
        %848 = vmatprep.mubr.f32.mxu0 %v694
        %849 = vmatmul.mubr.f32.gmra.mrb[0].mxu0 %v693
        %v850 = vpop.f32.mrb[0].mxu0
        %v851 = vadd.f32 %v758, %v850
        %v852 = vpop.f32.mrb[0].mxu0
        %853 = vmatprep.mubr.f32.mxu0 %v697
        %854 = vmatmul.mubr.f32.gmra.mrb[0].mxu0 %v696
        %v855 = vpop.f32.mrb[0].mxu0
        %v856 = vadd.f32 %v758, %v855
        %v857 = vpop.f32.mrb[0].mxu0
        %858 = vmatprep.mubr.f32.mxu0 %v700
        %859 = vmatmul.mubr.f32.gmra.mrb[0].mxu0 %v699
        %v860 = vpop.f32.mrb[0].mxu0
        %v861 = vadd.f32 %v758, %v860
        %v862 = vpop.f32.mrb[0].mxu0
        %863 = vmatprep.mubr.f32.mxu0 %v703
        %864 = vmatmul.mubr.f32.gmra.mrb[0].mxu0 %v702
        %v865 = vpop.f32.mrb[0].mxu0
        %v866 = vadd.f32 %v758, %v865
        %v867 = vpop.f32.mrb[0].mxu0
        %868 = vmatprep.mubr.f32.mxu0 %v706
        %869 = vmatmul.mubr.f32.gmra.mrb[0].mxu0 %v705
        %v870 = vpop.f32.mrb[0].mxu0
        %v871 = vadd.f32 %v758, %v870
        %v872 = vpop.f32.mrb[0].mxu0
        %873 = vmatprep.mubr.f32.mxu0 %v709
        %874 = vmatmul.mubr.f32.gmra.mrb[0].mxu0 %v708
        %v875 = vpop.f32.mrb[0].mxu0
        %v876 = vadd.f32 %v758, %v875
        %v877 = vpop.f32.mrb[0].mxu0
        %878 = vmatprep.mubr.f32.mxu0 %v712
        %879 = vmatmul.mubr.f32.gmra.mrb[0].mxu0 %v711
        %v880 = vpop.f32.mrb[0].mxu0
        %v881 = vadd.f32 %v758, %v880
        %v882 = vpop.f32.mrb[0].mxu0
        %883 = vmatprep.mubr.f32.mxu0 %v715
        %884 = vmatmul.mubr.f32.gmra.mrb[0].mxu0 %v714
        %v885 = vpop.f32.mrb[0].mxu0
        %v886 = vadd.f32 %v758, %v885
        %v887 = vpop.f32.mrb[0].mxu0
        %888 = vdwg.mxu0
        %889 = vmatprep.subr.mxu0 0.0
        %890 = vmatpush1.msra.mxu0 %v749
        %891 = vmatprep.subr.mxu0 0.0
        %892 = vmatpush1.msra.mxu0 %v750
        %893 = vmatprep.subr.mxu0 0.0
        %894 = vmatpush1.msra.mxu0 %v751
        %895 = vmatprep.subr.mxu0 0.0
        %896 = vmatpush1.msra.mxu0 %v752
        %897 = vmatprep.subr.mxu0 0.0
        %898 = vmatpush1.msra.mxu0 0.0
        %899 = vmatprep.subr.mxu0 0.0
        %900 = vmatpush1.msra.mxu0 0.0
        %901 = vmatprep.subr.mxu0 0.0
        %902 = vmatpush1.msra.mxu0 0.0
        %903 = vmatprep.subr.mxu0 0.0
        %904 = vmatpush1.msra.mxu0 0.0
        %905 = vmatprep.subr.mxu0 0.0
        %906 = vmatpush1.msra.mxu0 0.0
        %907 = vmatprep.subr.mxu0 0.0
        %908 = vmatpush1.msra.mxu0 0.0
        %909 = vmatprep.subr.mxu0 0.0
        %910 = vmatpush1.msra.mxu0 0.0
        %911 = vmatprep.subr.mxu0 0.0
        %912 = vmatpush1.msra.mxu0 0.0
        %913 = vmatprep.subr.mxu0 0.0
        %914 = vmatpush1.msra.mxu0 0.0
        %915 = vmatprep.subr.mxu0 0.0
        %916 = vmatpush1.msra.mxu0 0.0
        %917 = vmatprep.subr.mxu0 0.0
        %918 = vmatpush1.msra.mxu0 0.0
        %919 = vmatprep.subr.mxu0 0.0
        %920 = vmatpush1.msra.mxu0 0.0
        %921 = vmatprep.subr.mxu0 0.0
        %922 = vmatpush1.msra.mxu0 0.0
        %923 = vmatprep.subr.mxu0 0.0
        %924 = vmatpush1.msra.mxu0 0.0
        %925 = vmatprep.subr.mxu0 0.0
        %926 = vmatpush1.msra.mxu0 0.0
        %927 = vmatprep.subr.mxu0 0.0
        %928 = vmatpush1.msra.mxu0 0.0
        %929 = vmatprep.subr.mxu0 0.0
        %930 = vmatpush1.msra.mxu0 0.0
        %931 = vmatprep.subr.mxu0 0.0
        %932 = vmatpush1.msra.mxu0 0.0
        %933 = vmatprep.subr.mxu0 0.0
        %934 = vmatpush1.msra.mxu0 0.0
        %935 = vmatprep.subr.mxu0 0.0
        %936 = vmatpush1.msra.mxu0 0.0
        %937 = vmatprep.subr.mxu0 0.0
        %938 = vmatpush1.msra.mxu0 0.0
        %939 = vmatprep.subr.mxu0 0.0
        %940 = vmatpush1.msra.mxu0 0.0
        %941 = vmatprep.subr.mxu0 0.0
        %942 = vmatpush1.msra.mxu0 0.0
        %943 = vmatprep.subr.mxu0 0.0
        %944 = vmatpush1.msra.mxu0 0.0
        %945 = vmatprep.subr.mxu0 0.0
        %946 = vmatpush1.msra.mxu0 0.0
        %947 = vmatprep.subr.mxu0 0.0
        %948 = vmatpush1.msra.mxu0 0.0
        %949 = vmatprep.subr.mxu0 0.0
        %950 = vmatpush1.msra.mxu0 0.0
        %951 = vmatprep.subr.mxu0 0.0
        %952 = vmatpush1.msra.mxu0 0.0
        %953 = vmatprep.mubr.f32.mxu0 0.0
        %954 = vmatmul.mubr.f32.gmra.mrb[0].mxu0 %v761
        %v955 = vpop.f32.mrb[0].mxu0
        %v956 = vadd.f32 %v851, %v955
        %v957 = vpop.f32.mrb[0].mxu0
        %958 = vmatprep.mubr.f32.mxu0 0.0
        %959 = vmatmul.mubr.f32.gmra.mrb[0].mxu0 %v764
        %v960 = vpop.f32.mrb[0].mxu0
        %v961 = vadd.f32 %v856, %v960
        %v962 = vpop.f32.mrb[0].mxu0
        %963 = vmatprep.mubr.f32.mxu0 0.0
        %964 = vmatmul.mubr.f32.gmra.mrb[0].mxu0 %v767
        %v965 = vpop.f32.mrb[0].mxu0
        %v966 = vadd.f32 %v861, %v965
        %v967 = vpop.f32.mrb[0].mxu0
        %968 = vmatprep.mubr.f32.mxu0 0.0
        %969 = vmatmul.mubr.f32.gmra.mrb[0].mxu0 %v770
        %v970 = vpop.f32.mrb[0].mxu0
        %v971 = vadd.f32 %v866, %v970
        %v972 = vpop.f32.mrb[0].mxu0
        %973 = vmatprep.mubr.f32.mxu0 0.0
        %974 = vmatmul.mubr.f32.gmra.mrb[0].mxu0 %v773
        %v975 = vpop.f32.mrb[0].mxu0
        %v976 = vadd.f32 %v871, %v975
        %v977 = vpop.f32.mrb[0].mxu0
        %978 = vmatprep.mubr.f32.mxu0 0.0
        %979 = vmatmul.mubr.f32.gmra.mrb[0].mxu0 %v776
        %v980 = vpop.f32.mrb[0].mxu0
        %v981 = vadd.f32 %v876, %v980
        %v982 = vpop.f32.mrb[0].mxu0
        %983 = vmatprep.mubr.f32.mxu0 0.0
        %984 = vmatmul.mubr.f32.gmra.mrb[0].mxu0 %v779
        %v985 = vpop.f32.mrb[0].mxu0
        %v986 = vadd.f32 %v881, %v985
        %v987 = vpop.f32.mrb[0].mxu0
        %988 = vmatprep.mubr.f32.mxu0 0.0
        %989 = vmatmul.mubr.f32.gmra.mrb[0].mxu0 %v782
        %v990 = vpop.f32.mrb[0].mxu0
        %v991 = vadd.f32 %v886, %v990
        %v992 = vpop.f32.mrb[0].mxu0
        %993 = vdwg.mxu0
        %v994 = vmax.f32 %v956, 0.0
        %v995 = vmax.f32 %v961, 0.0
        %v996 = vmax.f32 %v966, 0.0
        %v997 = vmax.f32 %v971, 0.0
        %v998 = vmax.f32 %v976, 0.0
        %v999 = vmax.f32 %v981, 0.0
        %v1000 = vmax.f32 %v986, 0.0
        %v1001 = vmax.f32 %v991, 0.0
        %s1002 = scalar_lea.vmem [#allocation3], 8
        %1003 = vst.msk [vmem:[%s1002] sm:$0xff] %vm277, %v994
        %1004 = vst.msk [vmem:[%s1002 + $0x8] sm:$0xff] %vm277, %v995
        %1005 = vst.msk [vmem:[%s1002 + $0x10] sm:$0xff] %vm277, %v996
        %1006 = vst.msk [vmem:[%s1002 + $0x18] sm:$0xff] %vm277, %v997
        %1007 = vst.msk [vmem:[%s1002 + $0x20] sm:$0xff] %vm277, %v998
        %1008 = vst.msk [vmem:[%s1002 + $0x28] sm:$0xff] %vm277, %v999
        %1009 = vst.msk [vmem:[%s1002 + $0x30] sm:$0xff] %vm277, %v1000
        %1010 = vst.msk [vmem:[%s1002 + $0x38] sm:$0xff] %vm277, %v1001
        %v1011 = vld [vmem:[#allocation3] sm:$0xff]
        %v1012 = vld [vmem:[#allocation3 + $0x8] sm:$0xff]
        %v1013 = vld [vmem:[#allocation3 + $0x10] sm:$0xff]
        %v1014 = vld [vmem:[#allocation3 + $0x18] sm:$0xff]
        %v1015 = vld [vmem:[#allocation3 + $0x20] sm:$0xff]
        %v1016 = vld [vmem:[#allocation3 + $0x28] sm:$0xff]
        %v1017 = vld [vmem:[#allocation3 + $0x30] sm:$0xff]
        %v1018 = vld [vmem:[#allocation3 + $0x38] sm:$0xff]
        %v1019 = vrot.slane %v1011, 7
        %v1020 = vrot.slane %v1012, 7
        %v1021 = vrot.slane %v1013, 7
        %v1022 = vrot.slane %v1014, 7
        %v1023 = vrot.slane %v1015, 7
        %v1024 = vrot.slane %v1016, 7
        %v1025 = vrot.slane %v1017, 7
        %v1026 = vrot.slane %v1018, 7
        %v1027 = vsel %vm311, 0.0, %v1019
        %v1028 = vsel %vm311, 0.0, %v1020
        %v1029 = vsel %vm311, 0.0, %v1021
        %v1030 = vsel %vm311, 0.0, %v1022
        %v1031 = vsel %vm311, 0.0, %v1023
        %v1032 = vsel %vm311, 0.0, %v1024
        %v1033 = vsel %vm311, 0.0, %v1025
        %v1034 = vsel %vm311, 0.0, %v1026
        %v1035 = vrot.slane %v1011, 1
        %v1036 = vrot.slane %v1012, 1
        %v1037 = vrot.slane %v1013, 1
        %v1038 = vrot.slane %v1014, 1
        %v1039 = vrot.slane %v1015, 1
        %v1040 = vrot.slane %v1016, 1
        %v1041 = vrot.slane %v1017, 1
        %v1042 = vrot.slane %v1018, 1
        %v1043 = vsel %vm328, 0.0, %v1035
        %v1044 = vsel %vm328, 0.0, %v1036
        %v1045 = vsel %vm328, 0.0, %v1037
        %v1046 = vsel %vm328, 0.0, %v1038
        %v1047 = vsel %vm328, 0.0, %v1039
        %v1048 = vsel %vm328, 0.0, %v1040
        %v1049 = vsel %vm328, 0.0, %v1041
        %v1050 = vsel %vm328, 0.0, %v1042
        %1051 = vst.msk [vmem:[#allocation4] sm:$0xff] %vm277, %v1027
        %1052 = vst.msk [vmem:[#allocation4 + $0x18] sm:$0xff] %vm277, %v1028
        %1053 = vst.msk [vmem:[#allocation4 + $0x30] sm:$0xff] %vm277, %v1029
        %1054 = vst.msk [vmem:[#allocation4 + $0x48] sm:$0xff] %vm277, %v1030
        %1055 = vst.msk [vmem:[#allocation4 + $0x60] sm:$0xff] %vm277, %v1031
        %1056 = vst.msk [vmem:[#allocation4 + $0x78] sm:$0xff] %vm277, %v1032
        %1057 = vst.msk [vmem:[#allocation4 + $0x90] sm:$0xff] %vm277, %v1033
        %1058 = vst.msk [vmem:[#allocation4 + $0xa8] sm:$0xff] %vm277, %v1034
        %1067 = vrot.lane.b32.xlu0 %v1011, 32
        %v1068 = vpop.permute.xlu0 %1067
        %1069 = vrot.lane.b32.xlu0 %v1012, 32
        %v1070 = vpop.permute.xlu0 %1069
        %1071 = vrot.lane.b32.xlu0 %v1013, 32
        %v1072 = vpop.permute.xlu0 %1071
        %1073 = vrot.lane.b32.xlu0 %v1014, 32
        %v1074 = vpop.permute.xlu0 %1073
        %1075 = vrot.lane.b32.xlu0 %v1015, 32
        %v1076 = vpop.permute.xlu0 %1075
        %1077 = vrot.lane.b32.xlu0 %v1016, 32
        %v1078 = vpop.permute.xlu0 %1077
        %1079 = vrot.lane.b32.xlu0 %v1017, 32
        %v1080 = vpop.permute.xlu0 %1079
        %1081 = vrot.lane.b32.xlu0 %v1018, 32
        %v1082 = vpop.permute.xlu0 %1081
        %1091 = vst.msk [vmem:[#allocation4] sm:$0xff] %vm385, %v1068
        %1092 = vst.msk [vmem:[#allocation4 + $0x18] sm:$0xff] %vm385, %v1070
        %1093 = vst.msk [vmem:[#allocation4 + $0x30] sm:$0xff] %vm385, %v1072
        %1094 = vst.msk [vmem:[#allocation4 + $0x48] sm:$0xff] %vm385, %v1074
        %1095 = vst.msk [vmem:[#allocation4 + $0x60] sm:$0xff] %vm385, %v1076
        %1096 = vst.msk [vmem:[#allocation4 + $0x78] sm:$0xff] %vm385, %v1078
        %1097 = vst.msk [vmem:[#allocation4 + $0x90] sm:$0xff] %vm385, %v1080
        %1098 = vst.msk [vmem:[#allocation4 + $0xa8] sm:$0xff] %vm385, %v1082
        %1107 = vrot.lane.b32.xlu0 %v1043, 64
        %v1108 = vpop.permute.xlu0 %1107
        %1109 = vrot.lane.b32.xlu0 %v1044, 64
        %v1110 = vpop.permute.xlu0 %1109
        %1111 = vrot.lane.b32.xlu0 %v1045, 64
        %v1112 = vpop.permute.xlu0 %1111
        %1113 = vrot.lane.b32.xlu0 %v1046, 64
        %v1114 = vpop.permute.xlu0 %1113
        %1115 = vrot.lane.b32.xlu0 %v1047, 64
        %v1116 = vpop.permute.xlu0 %1115
        %1117 = vrot.lane.b32.xlu0 %v1048, 64
        %v1118 = vpop.permute.xlu0 %1117
        %1119 = vrot.lane.b32.xlu0 %v1049, 64
        %v1120 = vpop.permute.xlu0 %1119
        %1121 = vrot.lane.b32.xlu0 %v1050, 64
        %v1122 = vpop.permute.xlu0 %1121
        %1131 = vst.msk [vmem:[#allocation4] sm:$0xff] %vm426, %v1108
        %1132 = vst.msk [vmem:[#allocation4 + $0x18] sm:$0xff] %vm426, %v1110
        %1133 = vst.msk [vmem:[#allocation4 + $0x30] sm:$0xff] %vm426, %v1112
        %1134 = vst.msk [vmem:[#allocation4 + $0x48] sm:$0xff] %vm426, %v1114
        %1135 = vst.msk [vmem:[#allocation4 + $0x60] sm:$0xff] %vm426, %v1116
        %1136 = vst.msk [vmem:[#allocation4 + $0x78] sm:$0xff] %vm426, %v1118
        %1137 = vst.msk [vmem:[#allocation4 + $0x90] sm:$0xff] %vm426, %v1120
        %1138 = vst.msk [vmem:[#allocation4 + $0xa8] sm:$0xff] %vm426, %v1122
        %v1139 = vld [vmem:[%s1002] sm:$0xff]
        %v1140 = vld [vmem:[%s1002 + $0x8] sm:$0xff]
        %v1141 = vld [vmem:[%s1002 + $0x10] sm:$0xff]
        %v1142 = vld [vmem:[%s1002 + $0x18] sm:$0xff]
        %v1143 = vld [vmem:[%s1002 + $0x20] sm:$0xff]
        %v1144 = vld [vmem:[%s1002 + $0x28] sm:$0xff]
        %v1145 = vld [vmem:[%s1002 + $0x30] sm:$0xff]
        %v1146 = vld [vmem:[%s1002 + $0x38] sm:$0xff]
        %v1147 = vrot.slane %v1139, 7
        %v1148 = vrot.slane %v1140, 7
        %v1149 = vrot.slane %v1141, 7
        %v1150 = vrot.slane %v1142, 7
        %v1151 = vrot.slane %v1143, 7
        %v1152 = vrot.slane %v1144, 7
        %v1153 = vrot.slane %v1145, 7
        %v1154 = vrot.slane %v1146, 7
        %v1155 = vsel %vm311, 0.0, %v1147
        %v1156 = vsel %vm311, 0.0, %v1148
        %v1157 = vsel %vm311, 0.0, %v1149
        %v1158 = vsel %vm311, 0.0, %v1150
        %v1159 = vsel %vm311, 0.0, %v1151
        %v1160 = vsel %vm311, 0.0, %v1152
        %v1161 = vsel %vm311, 0.0, %v1153
        %v1162 = vsel %vm311, 0.0, %v1154
        %v1163 = vrot.slane %v1139, 1
        %v1164 = vrot.slane %v1140, 1
        %v1165 = vrot.slane %v1141, 1
        %v1166 = vrot.slane %v1142, 1
        %v1167 = vrot.slane %v1143, 1
        %v1168 = vrot.slane %v1144, 1
        %v1169 = vrot.slane %v1145, 1
        %v1170 = vrot.slane %v1146, 1
        %v1171 = vsel %vm328, 0.0, %v1163
        %v1172 = vsel %vm328, 0.0, %v1164
        %v1173 = vsel %vm328, 0.0, %v1165
        %v1174 = vsel %vm328, 0.0, %v1166
        %v1175 = vsel %vm328, 0.0, %v1167
        %v1176 = vsel %vm328, 0.0, %v1168
        %v1177 = vsel %vm328, 0.0, %v1169
        %v1178 = vsel %vm328, 0.0, %v1170
        %1187 = vrot.lane.b32.xlu0 %v1155, 96
        %v1188 = vpop.permute.xlu0 %1187
        %1189 = vrot.lane.b32.xlu0 %v1156, 96
        %v1190 = vpop.permute.xlu0 %1189
        %1191 = vrot.lane.b32.xlu0 %v1157, 96
        %v1192 = vpop.permute.xlu0 %1191
        %1193 = vrot.lane.b32.xlu0 %v1158, 96
        %v1194 = vpop.permute.xlu0 %1193
        %1195 = vrot.lane.b32.xlu0 %v1159, 96
        %v1196 = vpop.permute.xlu0 %1195
        %1197 = vrot.lane.b32.xlu0 %v1160, 96
        %v1198 = vpop.permute.xlu0 %1197
        %1199 = vrot.lane.b32.xlu0 %v1161, 96
        %v1200 = vpop.permute.xlu0 %1199
        %1201 = vrot.lane.b32.xlu0 %v1162, 96
        %v1202 = vpop.permute.xlu0 %1201
        %1211 = vst.msk [vmem:[#allocation4] sm:$0xff] %vm507, %v1188
        %1212 = vst.msk [vmem:[#allocation4 + $0x18] sm:$0xff] %vm507, %v1190
        %1213 = vst.msk [vmem:[#allocation4 + $0x30] sm:$0xff] %vm507, %v1192
        %1214 = vst.msk [vmem:[#allocation4 + $0x48] sm:$0xff] %vm507, %v1194
        %1215 = vst.msk [vmem:[#allocation4 + $0x60] sm:$0xff] %vm507, %v1196
        %1216 = vst.msk [vmem:[#allocation4 + $0x78] sm:$0xff] %vm507, %v1198
        %1217 = vst.msk [vmem:[#allocation4 + $0x90] sm:$0xff] %vm507, %v1200
        %1218 = vst.msk [vmem:[#allocation4 + $0xa8] sm:$0xff] %vm507, %v1202
        %1219 = vst.msk [vmem:[#allocation4 + $0x8] sm:$0xff] %vm277, %v1139
        %1220 = vst.msk [vmem:[#allocation4 + $0x20] sm:$0xff] %vm277, %v1140
        %1221 = vst.msk [vmem:[#allocation4 + $0x38] sm:$0xff] %vm277, %v1141
        %1222 = vst.msk [vmem:[#allocation4 + $0x50] sm:$0xff] %vm277, %v1142
        %1223 = vst.msk [vmem:[#allocation4 + $0x68] sm:$0xff] %vm277, %v1143
        %1224 = vst.msk [vmem:[#allocation4 + $0x80] sm:$0xff] %vm277, %v1144
        %1225 = vst.msk [vmem:[#allocation4 + $0x98] sm:$0xff] %vm277, %v1145
        %1226 = vst.msk [vmem:[#allocation4 + $0xb0] sm:$0xff] %vm277, %v1146
        %1235 = vrot.lane.b32.xlu0 %v1171, 32
        %v1236 = vpop.permute.xlu0 %1235
        %1237 = vrot.lane.b32.xlu0 %v1172, 32
        %v1238 = vpop.permute.xlu0 %1237
        %1239 = vrot.lane.b32.xlu0 %v1173, 32
        %v1240 = vpop.permute.xlu0 %1239
        %1241 = vrot.lane.b32.xlu0 %v1174, 32
        %v1242 = vpop.permute.xlu0 %1241
        %1243 = vrot.lane.b32.xlu0 %v1175, 32
        %v1244 = vpop.permute.xlu0 %1243
        %1245 = vrot.lane.b32.xlu0 %v1176, 32
        %v1246 = vpop.permute.xlu0 %1245
        %1247 = vrot.lane.b32.xlu0 %v1177, 32
        %v1248 = vpop.permute.xlu0 %1247
        %1249 = vrot.lane.b32.xlu0 %v1178, 32
        %v1250 = vpop.permute.xlu0 %1249
        %1259 = vst.msk [vmem:[#allocation4 + $0x8] sm:$0xff] %vm385, %v1236
        %1260 = vst.msk [vmem:[#allocation4 + $0x20] sm:$0xff] %vm385, %v1238
        %1261 = vst.msk [vmem:[#allocation4 + $0x38] sm:$0xff] %vm385, %v1240
        %1262 = vst.msk [vmem:[#allocation4 + $0x50] sm:$0xff] %vm385, %v1242
        %1263 = vst.msk [vmem:[#allocation4 + $0x68] sm:$0xff] %vm385, %v1244
        %1264 = vst.msk [vmem:[#allocation4 + $0x80] sm:$0xff] %vm385, %v1246
        %1265 = vst.msk [vmem:[#allocation4 + $0x98] sm:$0xff] %vm385, %v1248
        %1266 = vst.msk [vmem:[#allocation4 + $0xb0] sm:$0xff] %vm385, %v1250
        %s1267 = scalar_lea.vmem [#allocation3], 16
        %v1268 = vld [vmem:[%s1267] sm:$0xff]
        %v1269 = vld [vmem:[%s1267 + $0x8] sm:$0xff]
        %v1270 = vld [vmem:[%s1267 + $0x10] sm:$0xff]
        %v1271 = vld [vmem:[%s1267 + $0x18] sm:$0xff]
        %v1272 = vld [vmem:[%s1267 + $0x20] sm:$0xff]
        %v1273 = vld [vmem:[%s1267 + $0x28] sm:$0xff]
        %v1274 = vld [vmem:[%s1267 + $0x30] sm:$0xff]
        %v1275 = vld [vmem:[%s1267 + $0x38] sm:$0xff]
        %v1276 = vrot.slane %v1268, 7
        %v1277 = vrot.slane %v1269, 7
        %v1278 = vrot.slane %v1270, 7
        %v1279 = vrot.slane %v1271, 7
        %v1280 = vrot.slane %v1272, 7
        %v1281 = vrot.slane %v1273, 7
        %v1282 = vrot.slane %v1274, 7
        %v1283 = vrot.slane %v1275, 7
        %v1284 = vsel %vm311, 0.0, %v1276
        %v1285 = vsel %vm311, 0.0, %v1277
        %v1286 = vsel %vm311, 0.0, %v1278
        %v1287 = vsel %vm311, 0.0, %v1279
        %v1288 = vsel %vm311, 0.0, %v1280
        %v1289 = vsel %vm311, 0.0, %v1281
        %v1290 = vsel %vm311, 0.0, %v1282
        %v1291 = vsel %vm311, 0.0, %v1283
        %v1292 = vrot.slane %v1268, 1
        %v1293 = vrot.slane %v1269, 1
        %v1294 = vrot.slane %v1270, 1
        %v1295 = vrot.slane %v1271, 1
        %v1296 = vrot.slane %v1272, 1
        %v1297 = vrot.slane %v1273, 1
        %v1298 = vrot.slane %v1274, 1
        %v1299 = vrot.slane %v1275, 1
        %v1300 = vsel %vm328, 0.0, %v1292
        %v1301 = vsel %vm328, 0.0, %v1293
        %v1302 = vsel %vm328, 0.0, %v1294
        %v1303 = vsel %vm328, 0.0, %v1295
        %v1304 = vsel %vm328, 0.0, %v1296
        %v1305 = vsel %vm328, 0.0, %v1297
        %v1306 = vsel %vm328, 0.0, %v1298
        %v1307 = vsel %vm328, 0.0, %v1299
        %1316 = vrot.lane.b32.xlu0 %v1284, 64
        %v1317 = vpop.permute.xlu0 %1316
        %1318 = vrot.lane.b32.xlu0 %v1285, 64
        %v1319 = vpop.permute.xlu0 %1318
        %1320 = vrot.lane.b32.xlu0 %v1286, 64
        %v1321 = vpop.permute.xlu0 %1320
        %1322 = vrot.lane.b32.xlu0 %v1287, 64
        %v1323 = vpop.permute.xlu0 %1322
        %1324 = vrot.lane.b32.xlu0 %v1288, 64
        %v1325 = vpop.permute.xlu0 %1324
        %1326 = vrot.lane.b32.xlu0 %v1289, 64
        %v1327 = vpop.permute.xlu0 %1326
        %1328 = vrot.lane.b32.xlu0 %v1290, 64
        %v1329 = vpop.permute.xlu0 %1328
        %1330 = vrot.lane.b32.xlu0 %v1291, 64
        %v1331 = vpop.permute.xlu0 %1330
        %1340 = vst.msk [vmem:[#allocation4 + $0x8] sm:$0xff] %vm426, %v1317
        %1341 = vst.msk [vmem:[#allocation4 + $0x20] sm:$0xff] %vm426, %v1319
        %1342 = vst.msk [vmem:[#allocation4 + $0x38] sm:$0xff] %vm426, %v1321
        %1343 = vst.msk [vmem:[#allocation4 + $0x50] sm:$0xff] %vm426, %v1323
        %1344 = vst.msk [vmem:[#allocation4 + $0x68] sm:$0xff] %vm426, %v1325
        %1345 = vst.msk [vmem:[#allocation4 + $0x80] sm:$0xff] %vm426, %v1327
        %1346 = vst.msk [vmem:[#allocation4 + $0x98] sm:$0xff] %vm426, %v1329
        %1347 = vst.msk [vmem:[#allocation4 + $0xb0] sm:$0xff] %vm426, %v1331
        %1356 = vrot.lane.b32.xlu0 %v1268, 96
        %v1357 = vpop.permute.xlu0 %1356
        %1358 = vrot.lane.b32.xlu0 %v1269, 96
        %v1359 = vpop.permute.xlu0 %1358
        %1360 = vrot.lane.b32.xlu0 %v1270, 96
        %v1361 = vpop.permute.xlu0 %1360
        %1362 = vrot.lane.b32.xlu0 %v1271, 96
        %v1363 = vpop.permute.xlu0 %1362
        %1364 = vrot.lane.b32.xlu0 %v1272, 96
        %v1365 = vpop.permute.xlu0 %1364
        %1366 = vrot.lane.b32.xlu0 %v1273, 96
        %v1367 = vpop.permute.xlu0 %1366
        %1368 = vrot.lane.b32.xlu0 %v1274, 96
        %v1369 = vpop.permute.xlu0 %1368
        %1370 = vrot.lane.b32.xlu0 %v1275, 96
        %v1371 = vpop.permute.xlu0 %1370
        %1380 = vst.msk [vmem:[#allocation4 + $0x8] sm:$0xff] %vm507, %v1357
        %1381 = vst.msk [vmem:[#allocation4 + $0x20] sm:$0xff] %vm507, %v1359
        %1382 = vst.msk [vmem:[#allocation4 + $0x38] sm:$0xff] %vm507, %v1361
        %1383 = vst.msk [vmem:[#allocation4 + $0x50] sm:$0xff] %vm507, %v1363
        %1384 = vst.msk [vmem:[#allocation4 + $0x68] sm:$0xff] %vm507, %v1365
        %1385 = vst.msk [vmem:[#allocation4 + $0x80] sm:$0xff] %vm507, %v1367
        %1386 = vst.msk [vmem:[#allocation4 + $0x98] sm:$0xff] %vm507, %v1369
        %1387 = vst.msk [vmem:[#allocation4 + $0xb0] sm:$0xff] %vm507, %v1371
        %1388 = vst.msk [vmem:[#allocation4 + $0x10] sm:$0xff] %vm277, %v1300
        %1389 = vst.msk [vmem:[#allocation4 + $0x28] sm:$0xff] %vm277, %v1301
        %1390 = vst.msk [vmem:[#allocation4 + $0x40] sm:$0xff] %vm277, %v1302
        %1391 = vst.msk [vmem:[#allocation4 + $0x58] sm:$0xff] %vm277, %v1303
        %1392 = vst.msk [vmem:[#allocation4 + $0x70] sm:$0xff] %vm277, %v1304
        %1393 = vst.msk [vmem:[#allocation4 + $0x88] sm:$0xff] %vm277, %v1305
        %1394 = vst.msk [vmem:[#allocation4 + $0xa0] sm:$0xff] %vm277, %v1306
        %1395 = vst.msk [vmem:[#allocation4 + $0xb8] sm:$0xff] %vm277, %v1307
        %v1396 = vld [vmem:[#allocation4] sm:$0xff]
        %v1397 = vld [vmem:[#allocation4 + $0x8] sm:$0xff]
        %v1398 = vld [vmem:[#allocation4 + $0x10] sm:$0xff]
        %v1399 = vld [vmem:[#allocation4 + $0x18] sm:$0xff]
        %v1400 = vld [vmem:[#allocation4 + $0x20] sm:$0xff]
        %v1401 = vld [vmem:[#allocation4 + $0x28] sm:$0xff]
        %v1402 = vld [vmem:[#allocation4 + $0x30] sm:$0xff]
        %v1403 = vld [vmem:[#allocation4 + $0x38] sm:$0xff]
        %v1404 = vld [vmem:[#allocation4 + $0x40] sm:$0xff]
        %v1405 = vld [vmem:[#allocation4 + $0x48] sm:$0xff]
        %v1406 = vld [vmem:[#allocation4 + $0x50] sm:$0xff]
        %v1407 = vld [vmem:[#allocation4 + $0x58] sm:$0xff]
        %v1408 = vld [vmem:[#allocation4 + $0x60] sm:$0xff]
        %v1409 = vld [vmem:[#allocation4 + $0x68] sm:$0xff]
        %v1410 = vld [vmem:[#allocation4 + $0x70] sm:$0xff]
        %v1411 = vld [vmem:[#allocation4 + $0x78] sm:$0xff]
        %v1412 = vld [vmem:[#allocation4 + $0x80] sm:$0xff]
        %v1413 = vld [vmem:[#allocation4 + $0x88] sm:$0xff]
        %v1414 = vld [vmem:[#allocation4 + $0x90] sm:$0xff]
        %v1415 = vld [vmem:[#allocation4 + $0x98] sm:$0xff]
        %v1416 = vld [vmem:[#allocation4 + $0xa0] sm:$0xff]
        %v1417 = vld [vmem:[#allocation4 + $0xa8] sm:$0xff]
        %v1418 = vld [vmem:[#allocation4 + $0xb0] sm:$0xff]
        %v1419 = vld [vmem:[#allocation4 + $0xb8] sm:$0xff]
        %v1420 = vld [vmem:[%s3] sm:$0xff]
        %v1421 = vld [vmem:[%s3 + $0x8] sm:$0xff]
        %v1422 = vld [vmem:[%s3 + $0x10] sm:$0xff]
        %v1423 = vld [vmem:[%s3 + $0x18] sm:$0xff]
        %v1424 = vld [vmem:[%s3 + $0x20] sm:$0xff]
        %v1425 = vld [vmem:[%s3 + $0x28] sm:$0xff]
        %v1426 = vld [vmem:[%s3 + $0x30] sm:$0xff]
        %v1427 = vld [vmem:[%s3 + $0x38] sm:$0xff]
        %v1428 = vld [vmem:[%s3 + $0x40] sm:$0xff]
        %v1429 = vld [vmem:[%s3 + $0x48] sm:$0xff]
        %v1430 = vld [vmem:[%s3 + $0x50] sm:$0xff]
        %v1431 = vld [vmem:[%s3 + $0x58] sm:$0xff]
        %v1432 = vld [vmem:[%s3 + $0x60] sm:$0xff]
        %v1433 = vld [vmem:[%s3 + $0x68] sm:$0xff]
        %v1434 = vld [vmem:[%s3 + $0x70] sm:$0xff]
        %v1435 = vld [vmem:[%s3 + $0x78] sm:$0xff]
        %v1436 = vld [vmem:[%s3 + $0x80] sm:$0xff]
        %v1437 = vld [vmem:[%s3 + $0x88] sm:$0xff]
        %v1438 = vld [vmem:[%s3 + $0x90] sm:$0xff]
        %v1439 = vld [vmem:[%s3 + $0x98] sm:$0xff]
        %v1440 = vld [vmem:[%s3 + $0xa0] sm:$0xff]
        %v1441 = vld [vmem:[%s3 + $0xa8] sm:$0xff]
        %v1442 = vld [vmem:[%s3 + $0xb0] sm:$0xff]
        %v1443 = vld [vmem:[%s3 + $0xb8] sm:$0xff]
        %v1444 = vld [vmem:[%s3 + $0xc0] sm:$0xff]
        %v1445 = vld [vmem:[%s3 + $0xc8] sm:$0xff]
        %v1446 = vld [vmem:[%s3 + $0xd0] sm:$0xff]
        %v1447 = vld [vmem:[%s3 + $0xd8] sm:$0xff]
        %v1448 = vld [vmem:[%s3 + $0xe0] sm:$0xff]
        %v1449 = vld [vmem:[%s3 + $0xe8] sm:$0xff]
        %v1450 = vld [vmem:[%s3 + $0xf0] sm:$0xff]
        %v1451 = vld [vmem:[%s3 + $0xf8] sm:$0xff]
        %v1452 = vld [vmem:[%s3 + $0x100] sm:$0xff]
        %v1453 = vld [vmem:[%s3 + $0x108] sm:$0xff]
        %v1454 = vld [vmem:[%s3 + $0x110] sm:$0xff]
        %v1455 = vld [vmem:[%s3 + $0x118] sm:$0xff]
        %v1456 = vld [vmem:[%s4] sm:$0x1]
        %v1458 = vlaneseq
        %v1459 = vshrl.u32 %v1458, 7
        %v1460 = vsub.s32 0, %v1459
        %v1461 = vrot.slane %v1456, %v1460
        %v1464 = vsel %vm277, %v1398, 0
        %v1467 = vsel %vm277, %v1401, 0
        %v1470 = vsel %vm277, %v1404, 0
        %v1473 = vsel %vm277, %v1407, 0
        %v1476 = vsel %vm277, %v1410, 0
        %v1479 = vsel %vm277, %v1413, 0
        %v1482 = vsel %vm277, %v1416, 0
        %v1485 = vsel %vm277, %v1419, 0
        %1487 = vmatprep.subr.mxu0 0.0
        %1488 = vmatpush1.msra.mxu0 %v1420
        %1489 = vmatprep.subr.mxu0 0.0
        %1490 = vmatpush1.msra.mxu0 %v1421
        %1491 = vmatprep.subr.mxu0 0.0
        %1492 = vmatpush1.msra.mxu0 %v1422
        %1493 = vmatprep.subr.mxu0 0.0
        %1494 = vmatpush1.msra.mxu0 %v1423
        %1495 = vmatprep.subr.mxu0 0.0
        %1496 = vmatpush1.msra.mxu0 %v1424
        %1497 = vmatprep.subr.mxu0 0.0
        %1498 = vmatpush1.msra.mxu0 %v1425
        %1499 = vmatprep.subr.mxu0 0.0
        %1500 = vmatpush1.msra.mxu0 %v1426
        %1501 = vmatprep.subr.mxu0 0.0
        %1502 = vmatpush1.msra.mxu0 %v1427
        %1503 = vmatprep.subr.mxu0 0.0
        %1504 = vmatpush1.msra.mxu0 %v1428
        %1505 = vmatprep.subr.mxu0 0.0
        %1506 = vmatpush1.msra.mxu0 %v1429
        %1507 = vmatprep.subr.mxu0 0.0
        %1508 = vmatpush1.msra.mxu0 %v1430
        %1509 = vmatprep.subr.mxu0 0.0
        %1510 = vmatpush1.msra.mxu0 %v1431
        %1511 = vmatprep.subr.mxu0 0.0
        %1512 = vmatpush1.msra.mxu0 %v1432
        %1513 = vmatprep.subr.mxu0 0.0
        %1514 = vmatpush1.msra.mxu0 %v1433
        %1515 = vmatprep.subr.mxu0 0.0
        %1516 = vmatpush1.msra.mxu0 %v1434
        %1517 = vmatprep.subr.mxu0 0.0
        %1518 = vmatpush1.msra.mxu0 %v1435
        %1519 = vmatprep.subr.mxu0 0.0
        %1520 = vmatpush1.msra.mxu0 %v1436
        %1521 = vmatprep.subr.mxu0 0.0
        %1522 = vmatpush1.msra.mxu0 %v1437
        %1523 = vmatprep.subr.mxu0 0.0
        %1524 = vmatpush1.msra.mxu0 %v1438
        %1525 = vmatprep.subr.mxu0 0.0
        %1526 = vmatpush1.msra.mxu0 %v1439
        %1527 = vmatprep.subr.mxu0 0.0
        %1528 = vmatpush1.msra.mxu0 %v1440
        %1529 = vmatprep.subr.mxu0 0.0
        %1530 = vmatpush1.msra.mxu0 %v1441
        %1531 = vmatprep.subr.mxu0 0.0
        %1532 = vmatpush1.msra.mxu0 %v1442
        %1533 = vmatprep.subr.mxu0 0.0
        %1534 = vmatpush1.msra.mxu0 %v1443
        %1535 = vmatprep.subr.mxu0 0.0
        %1536 = vmatpush1.msra.mxu0 %v1444
        %1537 = vmatprep.subr.mxu0 0.0
        %1538 = vmatpush1.msra.mxu0 %v1445
        %1539 = vmatprep.subr.mxu0 0.0
        %1540 = vmatpush1.msra.mxu0 %v1446
        %1541 = vmatprep.subr.mxu0 0.0
        %1542 = vmatpush1.msra.mxu0 %v1447
        %1543 = vmatprep.subr.mxu0 0.0
        %1544 = vmatpush1.msra.mxu0 %v1448
        %1545 = vmatprep.subr.mxu0 0.0
        %1546 = vmatpush1.msra.mxu0 %v1449
        %1547 = vmatprep.subr.mxu0 0.0
        %1548 = vmatpush1.msra.mxu0 %v1450
        %1549 = vmatprep.subr.mxu0 0.0
        %1550 = vmatpush1.msra.mxu0 %v1451
        %1551 = vmatprep.mubr.f32.mxu0 %v1397
        %1552 = vmatmul.mubr.f32.gmra.mrb[0].mxu0 %v1396
        %v1553 = vpop.f32.mrb[0].mxu0
        %v1554 = vadd.f32 %v1461, %v1553
        %v1555 = vpop.f32.mrb[0].mxu0
        %1556 = vmatprep.mubr.f32.mxu0 %v1400
        %1557 = vmatmul.mubr.f32.gmra.mrb[0].mxu0 %v1399
        %v1558 = vpop.f32.mrb[0].mxu0
        %v1559 = vadd.f32 %v1461, %v1558
        %v1560 = vpop.f32.mrb[0].mxu0
        %1561 = vmatprep.mubr.f32.mxu0 %v1403
        %1562 = vmatmul.mubr.f32.gmra.mrb[0].mxu0 %v1402
        %v1563 = vpop.f32.mrb[0].mxu0
        %v1564 = vadd.f32 %v1461, %v1563
        %v1565 = vpop.f32.mrb[0].mxu0
        %1566 = vmatprep.mubr.f32.mxu0 %v1406
        %1567 = vmatmul.mubr.f32.gmra.mrb[0].mxu0 %v1405
        %v1568 = vpop.f32.mrb[0].mxu0
        %v1569 = vadd.f32 %v1461, %v1568
        %v1570 = vpop.f32.mrb[0].mxu0
        %1571 = vmatprep.mubr.f32.mxu0 %v1409
        %1572 = vmatmul.mubr.f32.gmra.mrb[0].mxu0 %v1408
        %v1573 = vpop.f32.mrb[0].mxu0
        %v1574 = vadd.f32 %v1461, %v1573
        %v1575 = vpop.f32.mrb[0].mxu0
        %1576 = vmatprep.mubr.f32.mxu0 %v1412
        %1577 = vmatmul.mubr.f32.gmra.mrb[0].mxu0 %v1411
        %v1578 = vpop.f32.mrb[0].mxu0
        %v1579 = vadd.f32 %v1461, %v1578
        %v1580 = vpop.f32.mrb[0].mxu0
        %1581 = vmatprep.mubr.f32.mxu0 %v1415
        %1582 = vmatmul.mubr.f32.gmra.mrb[0].mxu0 %v1414
        %v1583 = vpop.f32.mrb[0].mxu0
        %v1584 = vadd.f32 %v1461, %v1583
        %v1585 = vpop.f32.mrb[0].mxu0
        %1586 = vmatprep.mubr.f32.mxu0 %v1418
        %1587 = vmatmul.mubr.f32.gmra.mrb[0].mxu0 %v1417
        %v1588 = vpop.f32.mrb[0].mxu0
        %v1589 = vadd.f32 %v1461, %v1588
        %v1590 = vpop.f32.mrb[0].mxu0
        %1591 = vdwg.mxu0
        %1592 = vmatprep.subr.mxu0 0.0
        %1593 = vmatpush1.msra.mxu0 %v1452
        %1594 = vmatprep.subr.mxu0 0.0
        %1595 = vmatpush1.msra.mxu0 %v1453
        %1596 = vmatprep.subr.mxu0 0.0
        %1597 = vmatpush1.msra.mxu0 %v1454
        %1598 = vmatprep.subr.mxu0 0.0
        %1599 = vmatpush1.msra.mxu0 %v1455
        %1600 = vmatprep.subr.mxu0 0.0
        %1601 = vmatpush1.msra.mxu0 0.0
        %1602 = vmatprep.subr.mxu0 0.0
        %1603 = vmatpush1.msra.mxu0 0.0
        %1604 = vmatprep.subr.mxu0 0.0
        %1605 = vmatpush1.msra.mxu0 0.0
        %1606 = vmatprep.subr.mxu0 0.0
        %1607 = vmatpush1.msra.mxu0 0.0
        %1608 = vmatprep.subr.mxu0 0.0
        %1609 = vmatpush1.msra.mxu0 0.0
        %1610 = vmatprep.subr.mxu0 0.0
        %1611 = vmatpush1.msra.mxu0 0.0
        %1612 = vmatprep.subr.mxu0 0.0
        %1613 = vmatpush1.msra.mxu0 0.0
        %1614 = vmatprep.subr.mxu0 0.0
        %1615 = vmatpush1.msra.mxu0 0.0
        %1616 = vmatprep.subr.mxu0 0.0
        %1617 = vmatpush1.msra.mxu0 0.0
        %1618 = vmatprep.subr.mxu0 0.0
        %1619 = vmatpush1.msra.mxu0 0.0
        %1620 = vmatprep.subr.mxu0 0.0
        %1621 = vmatpush1.msra.mxu0 0.0
        %1622 = vmatprep.subr.mxu0 0.0
        %1623 = vmatpush1.msra.mxu0 0.0
        %1624 = vmatprep.subr.mxu0 0.0
        %1625 = vmatpush1.msra.mxu0 0.0
        %1626 = vmatprep.subr.mxu0 0.0
        %1627 = vmatpush1.msra.mxu0 0.0
        %1628 = vmatprep.subr.mxu0 0.0
        %1629 = vmatpush1.msra.mxu0 0.0
        %1630 = vmatprep.subr.mxu0 0.0
        %1631 = vmatpush1.msra.mxu0 0.0
        %1632 = vmatprep.subr.mxu0 0.0
        %1633 = vmatpush1.msra.mxu0 0.0
        %1634 = vmatprep.subr.mxu0 0.0
        %1635 = vmatpush1.msra.mxu0 0.0
        %1636 = vmatprep.subr.mxu0 0.0
        %1637 = vmatpush1.msra.mxu0 0.0
        %1638 = vmatprep.subr.mxu0 0.0
        %1639 = vmatpush1.msra.mxu0 0.0
        %1640 = vmatprep.subr.mxu0 0.0
        %1641 = vmatpush1.msra.mxu0 0.0
        %1642 = vmatprep.subr.mxu0 0.0
        %1643 = vmatpush1.msra.mxu0 0.0
        %1644 = vmatprep.subr.mxu0 0.0
        %1645 = vmatpush1.msra.mxu0 0.0
        %1646 = vmatprep.subr.mxu0 0.0
        %1647 = vmatpush1.msra.mxu0 0.0
        %1648 = vmatprep.subr.mxu0 0.0
        %1649 = vmatpush1.msra.mxu0 0.0
        %1650 = vmatprep.subr.mxu0 0.0
        %1651 = vmatpush1.msra.mxu0 0.0
        %1652 = vmatprep.subr.mxu0 0.0
        %1653 = vmatpush1.msra.mxu0 0.0
        %1654 = vmatprep.subr.mxu0 0.0
        %1655 = vmatpush1.msra.mxu0 0.0
        %1656 = vmatprep.mubr.f32.mxu0 0.0
        %1657 = vmatmul.mubr.f32.gmra.mrb[0].mxu0 %v1464
        %v1658 = vpop.f32.mrb[0].mxu0
        %v1659 = vadd.f32 %v1554, %v1658
        %v1660 = vpop.f32.mrb[0].mxu0
        %1661 = vmatprep.mubr.f32.mxu0 0.0
        %1662 = vmatmul.mubr.f32.gmra.mrb[0].mxu0 %v1467
        %v1663 = vpop.f32.mrb[0].mxu0
        %v1664 = vadd.f32 %v1559, %v1663
        %v1665 = vpop.f32.mrb[0].mxu0
        %1666 = vmatprep.mubr.f32.mxu0 0.0
        %1667 = vmatmul.mubr.f32.gmra.mrb[0].mxu0 %v1470
        %v1668 = vpop.f32.mrb[0].mxu0
        %v1669 = vadd.f32 %v1564, %v1668
        %v1670 = vpop.f32.mrb[0].mxu0
        %1671 = vmatprep.mubr.f32.mxu0 0.0
        %1672 = vmatmul.mubr.f32.gmra.mrb[0].mxu0 %v1473
        %v1673 = vpop.f32.mrb[0].mxu0
        %v1674 = vadd.f32 %v1569, %v1673
        %v1675 = vpop.f32.mrb[0].mxu0
        %1676 = vmatprep.mubr.f32.mxu0 0.0
        %1677 = vmatmul.mubr.f32.gmra.mrb[0].mxu0 %v1476
        %v1678 = vpop.f32.mrb[0].mxu0
        %v1679 = vadd.f32 %v1574, %v1678
        %v1680 = vpop.f32.mrb[0].mxu0
        %1681 = vmatprep.mubr.f32.mxu0 0.0
        %1682 = vmatmul.mubr.f32.gmra.mrb[0].mxu0 %v1479
        %v1683 = vpop.f32.mrb[0].mxu0
        %v1684 = vadd.f32 %v1579, %v1683
        %v1685 = vpop.f32.mrb[0].mxu0
        %1686 = vmatprep.mubr.f32.mxu0 0.0
        %1687 = vmatmul.mubr.f32.gmra.mrb[0].mxu0 %v1482
        %v1688 = vpop.f32.mrb[0].mxu0
        %v1689 = vadd.f32 %v1584, %v1688
        %v1690 = vpop.f32.mrb[0].mxu0
        %1691 = vmatprep.mubr.f32.mxu0 0.0
        %1692 = vmatmul.mubr.f32.gmra.mrb[0].mxu0 %v1485
        %v1693 = vpop.f32.mrb[0].mxu0
        %v1694 = vadd.f32 %v1589, %v1693
        %v1695 = vpop.f32.mrb[0].mxu0
        %1696 = vdwg.mxu0
        %v1697 = vsel %vm277, %v1659, 0.0
        %v1698 = vsel %vm277, %v1664, 0.0
        %v1699 = vadd.f32 %v1697, %v1698
        %v1700 = vsel %vm277, %v1669, 0.0
        %v1701 = vadd.f32 %v1699, %v1700
        %v1702 = vsel %vm277, %v1674, 0.0
        %v1703 = vadd.f32 %v1701, %v1702
        %v1704 = vsel %vm277, %v1679, 0.0
        %v1705 = vadd.f32 %v1703, %v1704
        %v1706 = vsel %vm277, %v1684, 0.0
        %v1707 = vadd.f32 %v1705, %v1706
        %v1708 = vsel %vm277, %v1689, 0.0
        %v1709 = vadd.f32 %v1707, %v1708
        %v1710 = vsel %vm277, %v1694, 0.0
        %v1711 = vadd.f32 %v1709, %v1710
        %v1712 = vrot.slane %v1711, 4
        %v1713 = vadd.f32 %v1711, %v1712
        %v1714 = vrot.slane %v1713, 2
        %v1715 = vadd.f32 %v1713, %v1714
        %v1716 = vrot.slane %v1715, 1
        %v1717 = vadd.f32 %v1715, %v1716
        %v1718 = vmul.f32 %v1717, 0.015625
        %v1719 = vld [vmem:[%s5] sm:$0xff]
        %v1720 = vld [vmem:[%s5 + $0x8] sm:$0xff]
        %v1721 = vld [vmem:[%s5 + $0x10] sm:$0xff]
        %v1722 = vld [vmem:[%s5 + $0x18] sm:$0xff]
        %v1724 = vsel %vm277, %v1718, 0
        %1726 = vmatprep.subr.mxu0 0.0
        %1727 = vmatpush1.msra.mxu0 %v1719
        %1728 = vmatprep.subr.mxu0 0.0
        %1729 = vmatpush1.msra.mxu0 %v1720
        %1730 = vmatprep.subr.mxu0 0.0
        %1731 = vmatpush1.msra.mxu0 %v1721
        %1732 = vmatprep.subr.mxu0 0.0
        %1733 = vmatpush1.msra.mxu0 %v1722
        %1734 = vmatprep.subr.mxu0 0.0
        %1735 = vmatpush1.msra.mxu0 0.0
        %1736 = vmatprep.subr.mxu0 0.0
        %1737 = vmatpush1.msra.mxu0 0.0
        %1738 = vmatprep.subr.mxu0 0.0
        %1739 = vmatpush1.msra.mxu0 0.0
        %1740 = vmatprep.subr.mxu0 0.0
        %1741 = vmatpush1.msra.mxu0 0.0
        %1742 = vmatprep.subr.mxu0 0.0
        %1743 = vmatpush1.msra.mxu0 0.0
        %1744 = vmatprep.subr.mxu0 0.0
        %1745 = vmatpush1.msra.mxu0 0.0
        %1746 = vmatprep.subr.mxu0 0.0
        %1747 = vmatpush1.msra.mxu0 0.0
        %1748 = vmatprep.subr.mxu0 0.0
        %1749 = vmatpush1.msra.mxu0 0.0
        %1750 = vmatprep.subr.mxu0 0.0
        %1751 = vmatpush1.msra.mxu0 0.0
        %1752 = vmatprep.subr.mxu0 0.0
        %1753 = vmatpush1.msra.mxu0 0.0
        %1754 = vmatprep.subr.mxu0 0.0
        %1755 = vmatpush1.msra.mxu0 0.0
        %1756 = vmatprep.subr.mxu0 0.0
        %1757 = vmatpush1.msra.mxu0 0.0
        %1758 = vmatprep.subr.mxu0 0.0
        %1759 = vmatpush1.msra.mxu0 0.0
        %1760 = vmatprep.subr.mxu0 0.0
        %1761 = vmatpush1.msra.mxu0 0.0
        %1762 = vmatprep.subr.mxu0 0.0
        %1763 = vmatpush1.msra.mxu0 0.0
        %1764 = vmatprep.subr.mxu0 0.0
        %1765 = vmatpush1.msra.mxu0 0.0
        %1766 = vmatprep.subr.mxu0 0.0
        %1767 = vmatpush1.msra.mxu0 0.0
        %1768 = vmatprep.subr.mxu0 0.0
        %1769 = vmatpush1.msra.mxu0 0.0
        %1770 = vmatprep.subr.mxu0 0.0
        %1771 = vmatpush1.msra.mxu0 0.0
        %1772 = vmatprep.subr.mxu0 0.0
        %1773 = vmatpush1.msra.mxu0 0.0
        %1774 = vmatprep.subr.mxu0 0.0
        %1775 = vmatpush1.msra.mxu0 0.0
        %1776 = vmatprep.subr.mxu0 0.0
        %1777 = vmatpush1.msra.mxu0 0.0
        %1778 = vmatprep.subr.mxu0 0.0
        %1779 = vmatpush1.msra.mxu0 0.0
        %1780 = vmatprep.subr.mxu0 0.0
        %1781 = vmatpush1.msra.mxu0 0.0
        %1782 = vmatprep.subr.mxu0 0.0
        %1783 = vmatpush1.msra.mxu0 0.0
        %1784 = vmatprep.subr.mxu0 0.0
        %1785 = vmatpush1.msra.mxu0 0.0
        %1786 = vmatprep.subr.mxu0 0.0
        %1787 = vmatpush1.msra.mxu0 0.0
        %1788 = vmatprep.subr.mxu0 0.0
        %1789 = vmatpush1.msra.mxu0 0.0
        %1790 = vmatprep.mubr.f32.mxu0 0.0
        %1791 = vmatmul.mubr.f32.gmra.mrb[0].mxu0 %v1724
        %v1792 = vpop.f32.mrb[0].mxu0
        %v1793 = vadd.f32 0.0, %v1792
        %v1794 = vpop.f32.mrb[0].mxu0
        %1795 = vdwg.mxu0
        %v1796 = vmax.f32 %v1793, 0.0
        %v1797 = vld [vmem:[%s6] sm:$0x3]
        %vm1798 = vcmask 15360
        %v1800 = vsel %vm1798, %v1796, 0
        %vm1802 = vcmask 1041408
        %v1804 = vsel %vm1802, %v1797, 0
        %1806 = vmatprep.subr.mxu0 0.0
        %1807 = vmatpush1.msra.mxu0 %v1804
        %1808 = vmatprep.subr.mxu0 0.0
        %1809 = vmatpush1.msra.mxu0 0.0
        %1810 = vmatprep.subr.mxu0 0.0
        %1811 = vmatpush1.msra.mxu0 0.0
        %1812 = vmatprep.subr.mxu0 0.0
        %1813 = vmatpush1.msra.mxu0 0.0
        %1814 = vmatprep.subr.mxu0 0.0
        %1815 = vmatpush1.msra.mxu0 0.0
        %1816 = vmatprep.subr.mxu0 0.0
        %1817 = vmatpush1.msra.mxu0 0.0
        %1818 = vmatprep.subr.mxu0 0.0
        %1819 = vmatpush1.msra.mxu0 0.0
        %1820 = vmatprep.subr.mxu0 0.0
        %1821 = vmatpush1.msra.mxu0 0.0
        %1822 = vmatprep.subr.mxu0 0.0
        %1823 = vmatpush1.msra.mxu0 0.0
        %1824 = vmatprep.subr.mxu0 0.0
        %1825 = vmatpush1.msra.mxu0 0.0
        %1826 = vmatprep.subr.mxu0 0.0
        %1827 = vmatpush1.msra.mxu0 0.0
        %1828 = vmatprep.subr.mxu0 0.0
        %1829 = vmatpush1.msra.mxu0 0.0
        %1830 = vmatprep.subr.mxu0 0.0
        %1831 = vmatpush1.msra.mxu0 0.0
        %1832 = vmatprep.subr.mxu0 0.0
        %1833 = vmatpush1.msra.mxu0 0.0
        %1834 = vmatprep.subr.mxu0 0.0
        %1835 = vmatpush1.msra.mxu0 0.0
        %1836 = vmatprep.subr.mxu0 0.0
        %1837 = vmatpush1.msra.mxu0 0.0
        %1838 = vmatprep.subr.mxu0 0.0
        %1839 = vmatpush1.msra.mxu0 0.0
        %1840 = vmatprep.subr.mxu0 0.0
        %1841 = vmatpush1.msra.mxu0 0.0
        %1842 = vmatprep.subr.mxu0 0.0
        %1843 = vmatpush1.msra.mxu0 0.0
        %1844 = vmatprep.subr.mxu0 0.0
        %1845 = vmatpush1.msra.mxu0 0.0
        %1846 = vmatprep.subr.mxu0 0.0
        %1847 = vmatpush1.msra.mxu0 0.0
        %1848 = vmatprep.subr.mxu0 0.0
        %1849 = vmatpush1.msra.mxu0 0.0
        %1850 = vmatprep.subr.mxu0 0.0
        %1851 = vmatpush1.msra.mxu0 0.0
        %1852 = vmatprep.subr.mxu0 0.0
        %1853 = vmatpush1.msra.mxu0 0.0
        %1854 = vmatprep.subr.mxu0 0.0
        %1855 = vmatpush1.msra.mxu0 0.0
        %1856 = vmatprep.subr.mxu0 0.0
        %1857 = vmatpush1.msra.mxu0 0.0
        %1858 = vmatprep.subr.mxu0 0.0
        %1859 = vmatpush1.msra.mxu0 0.0
        %1860 = vmatprep.subr.mxu0 0.0
        %1861 = vmatpush1.msra.mxu0 0.0
        %1862 = vmatprep.subr.mxu0 0.0
        %1863 = vmatpush1.msra.mxu0 0.0
        %1864 = vmatprep.subr.mxu0 0.0
        %1865 = vmatpush1.msra.mxu0 0.0
        %1866 = vmatprep.subr.mxu0 0.0
        %1867 = vmatpush1.msra.mxu0 0.0
        %1868 = vmatprep.subr.mxu0 0.0
        %1869 = vmatpush1.msra.mxu0 0.0
        %1870 = vmatprep.mubr.f32.mxu0 0.0
        %1871 = vmatmul.mubr.f32.gmra.mrb[0].mxu0 %v1800
        %v1872 = vpop.f32.mrb[0].mxu0
        %v1873 = vadd.f32 0.0, %v1872
        %v1874 = vpop.f32.mrb[0].mxu0
        %1875 = vdwg.mxu0
        %v1876 = vxor.u32 %v1873, 2147483648
        %v1877 = vmul.f32 %v1876, 1.442695
        %v1878 = vpow.pop %v1877
        %v1879 = vadd.f32 %v1878, 1.0
        %v1880 = vrcp.pop %v1879
        %v1881 = vmul.f32 1.0, %v1880
        %v1882 = vld [vmem:[%s276] sm:$0xff]
        %v1883 = vld [vmem:[%s276 + $0x8] sm:$0xff]
        %v1884 = vld [vmem:[%s276 + $0x10] sm:$0xff]
        %v1885 = vld [vmem:[%s276 + $0x18] sm:$0xff]
        %v1886 = vld [vmem:[%s276 + $0x20] sm:$0xff]
        %v1887 = vld [vmem:[%s276 + $0x28] sm:$0xff]
        %v1888 = vld [vmem:[%s276 + $0x30] sm:$0xff]
        %v1889 = vld [vmem:[%s276 + $0x38] sm:$0xff]
        %v1890 = vlaneseq
        %v1891 = vshrl.u32 %v1890, 7
        %v1892 = vsub.s32 0, %v1891
        %v1893 = vrot.slane %v1881, %v1892
        %v1894 = vmul.f32 %v1659, %v1893
        %v1895 = vmul.f32 %v1664, %v1893
        %v1896 = vmul.f32 %v1669, %v1893
        %v1897 = vmul.f32 %v1674, %v1893
        %v1898 = vmul.f32 %v1679, %v1893
        %v1899 = vmul.f32 %v1684, %v1893
        %v1900 = vmul.f32 %v1689, %v1893
        %v1901 = vmul.f32 %v1694, %v1893
        %v1902 = vadd.f32 %v1894, %v1882
        %v1903 = vadd.f32 %v1895, %v1883
        %v1904 = vadd.f32 %v1896, %v1884
        %v1905 = vadd.f32 %v1897, %v1885
        %v1906 = vadd.f32 %v1898, %v1886
        %v1907 = vadd.f32 %v1899, %v1887
        %v1908 = vadd.f32 %v1900, %v1888
        %v1909 = vadd.f32 %v1901, %v1889
        %v1910 = vmax.f32 %v1902, 0.0
        %v1911 = vmax.f32 %v1903, 0.0
        %v1912 = vmax.f32 %v1904, 0.0
        %v1913 = vmax.f32 %v1905, 0.0
        %v1914 = vmax.f32 %v1906, 0.0
        %v1915 = vmax.f32 %v1907, 0.0
        %v1916 = vmax.f32 %v1908, 0.0
        %v1917 = vmax.f32 %v1909, 0.0
        %1918 = vst.msk [vmem:[%s271] sm:$0xff] %vm277, %v1910
        %1919 = vst.msk [vmem:[%s271 + $0x8] sm:$0xff] %vm277, %v1911
        %1920 = vst.msk [vmem:[%s271 + $0x10] sm:$0xff] %vm277, %v1912
        %1921 = vst.msk [vmem:[%s271 + $0x18] sm:$0xff] %vm277, %v1913
        %1922 = vst.msk [vmem:[%s271 + $0x20] sm:$0xff] %vm277, %v1914
        %1923 = vst.msk [vmem:[%s271 + $0x28] sm:$0xff] %vm277, %v1915
        %1924 = vst.msk [vmem:[%s271 + $0x30] sm:$0xff] %vm277, %v1916
        %1925 = vst.msk [vmem:[%s271 + $0x38] sm:$0xff] %vm277, %v1917
        %s1926 = sand.u32 %s181, 1
        %s1927 = scalar_lea.sflag [#allocation6], %s1926
        %s1928 = sand.u32 %s181, 1
        %s1929 = smul.addr %s1928, 64
        %s1930 = scalar_lea.vmem [#allocation5], %s1929
        // Predicated region
        $region49: #{residual_block_forward.1} parent=47 // pred_check
          %p1931 = pneg %p191
        $region50: #{residual_block_forward.1} parent=47 // pred_check_branch
          %1933 = sbr.rel (%p1931) target = $region52
        $region51: #{residual_block_forward.1} parent=47 // pred_region
          %s1935 = ssub.s32 1024, 1024
          %1936 = vsyncadd %s1927, %s1935
          %s1937 = smul.addr %s21, 8
          %s1938 = smul.addr %s1937, 128
          %s1939 = scalar_lea.hbm %s7, %s1938
          %s1940 = sshll.u32 %s1930, 4
          %s1941 = int_to_ptr.vmem [resolvable:$true] %s1940
          %1946 = dma.vmem_to_hbm [thread:$0]  %s1941, 1024, %s1939, %s1927, 128, 128, 8
        $region52: #{residual_block_forward.1} parent=47 // pred_fallthru
          _
      $region48: #{residual_block_forward.1} parent=5 // pred_fallthru
        _
      %p1947 = scmp.le.s32.totalorder 2, %s16
      // Predicated region
      $region53: #{residual_block_forward.1} parent=5 // pred_check
        %p1948 = pneg %p1947
      $region54: #{residual_block_forward.1} parent=5 // pred_check_branch
        %1950 = sbr.rel (%p1948) target = $region56
      $region55: #{residual_block_forward.1} parent=5 // pred_region
        %s1951 = ssub.s32 %s16, 2
        // Predicated region
        $region57: #{residual_block_forward.1} parent=55 // pred_check
          %p1952 = pneg %p197
        $region58: #{residual_block_forward.1} parent=55 // pred_check_branch
          %1954 = sbr.rel (%p1952) target = $region60
        $region59: #{residual_block_forward.1} parent=55 // pred_region
          %s1955 = sand.u32 %s182, 1
          %s1956 = scalar_lea.sflag [#allocation6], %s1955
          %s1957 = sand.u32 %s182, 1
          %s1958 = smul.addr %s1957, 64
          %s1959 = scalar_lea.vmem [#allocation5], %s1958
          %1960 = dma.done %s1956, 1024
        $region60: #{residual_block_forward.1} parent=55 // pred_fallthru
          _
      $region56: #{residual_block_forward.1} parent=5 // pred_fallthru
        _
    $region6: #{residual_block_forward.1} parent=1 // loop_footer
      %s20 = sadd.s32 1, %s16
    $region7: #{residual_block_forward.1} parent=1 // loop_footer_branch
      %15 = sbr.rel target = $region3
    $region8: #{residual_block_forward.1} parent=1 // loop_exit
      _
    %1961 = vsyncpa [#allocation6], 1
    %s1962 = scalar_lea.sflag [#allocation6], 1
    %1963 = vsyncpa %s1962, 1

</llo_original>
